<compile_context>
chip_gen: v5e
topology: v5e:2x2
jax: 0.10.0
libtpu: 0.0.40
codegen_flags: <defaults>
</compile_context>

<pallas_src>
import functools

import jax
import jax.numpy as jnp
from jax import lax
from jax.experimental import pallas as pl
from jax.experimental.pallas import tpu as pltpu

EPS = 1e-20
TEMP = 0.07


# ----------------------------------------------------------------------------
# Fused kernel: conv + ReLU + pooled head + L2 norm + Gram affinity + walks + CE
# ----------------------------------------------------------------------------
def _crw_kernel(p_ref, wc_ref, bc_ref, wh_ref, bh_ref, q_ref, st_ref, *, T, N):
    # ---- encoder: block-diagonal conv matmul + bias + ReLU -------------------
    conv = jnp.dot(p_ref[...], wc_ref[...], preferred_element_type=jnp.float32)
    conv = jnp.maximum(conv + bc_ref[...], 0.0)                    # (T*N, P*Cenc)

    # ---- mean-pool folded into the head matmul + bias + L2 normalize ---------
    h = jnp.dot(conv, wh_ref[...], preferred_element_type=jnp.float32) + bh_ref[...]
    sq = jnp.sum(h * h, axis=-1, keepdims=True)
    # F.normalize(p=2): torch clamps the norm at 1e-12; we clamp norm^2 at 1e-24.
    q = h * lax.rsqrt(jnp.maximum(sq, 1e-24))                      # (T*N, C)
    q_ref[...] = q

    # ---- one Gram matmul gives every adjacent-frame affinity -----------------
    qb = q.astype(jnp.bfloat16)                                    # bf16 MXU operands
    G = lax.dot_general(qb, qb, (((1,), (1,)), ((), ())),
                        preferred_element_type=jnp.float32) * (1.0 / TEMP)

    def rowsoftmax(m):
        mx = jnp.max(m, axis=-1, keepdims=True)
        e = jnp.exp(m - mx)
        return e / jnp.sum(e, axis=-1, keepdims=True)

    a12, a21 = [], []
    for t in range(T - 1):
        # A12[t] = softmax(q_t q_{t+1}^T / temp); A21[t] uses the mirrored block of
        # the symmetric Gram matrix (== the transpose), so no in-kernel transposes.
        a12.append(rowsoftmax(G[t * N:(t + 1) * N, (t + 1) * N:(t + 2) * N]))
        a21.append(rowsoftmax(G[(t + 1) * N:(t + 2) * N, t * N:(t + 1) * N]))

    # ---- cycle walks + cross-entropy vs identity targets ---------------------
    row = lax.broadcasted_iota(jnp.int32, (N, N), 0)
    col = lax.broadcasted_iota(jnp.int32, (N, N), 1)
    rows1 = lax.broadcasted_iota(jnp.int32, (N, 1), 0)
    lane = lax.broadcasted_iota(jnp.int32, (1, 128), 1)
    loss_row = jnp.zeros((1, 128), jnp.float32)
    acc_row = jnp.zeros((1, 128), jnp.float32)

    if T >= 3:
        left = a12[0]                      # prefix product of A12
        right = a21[0]                     # reversed prefix product of A21
        for i in range(1, T - 1):
            left = jnp.dot(left, a12[i], preferred_element_type=jnp.float32)
            right = jnp.dot(a21[i], right, preferred_element_type=jnp.float32)
            aa = jnp.dot(left, right, preferred_element_type=jnp.float32)

            # CE(log(aa+EPS), identity): logsumexp(log(aa+EPS)) == log(rowsum + N*EPS)
            lse = jnp.log(jnp.sum(aa, axis=-1, keepdims=True) + N * EPS)
            diag = jnp.sum(jnp.where(row == col, aa, 0.0), axis=-1, keepdims=True)
            loss_rows = lse - jnp.log(diag + EPS)                  # (N, 1)

            # torch.argmax (first-max) semantics via float equality with the row max.
            mx = jnp.max(aa, axis=-1, keepdims=True)
            first_max = jnp.min(jnp.where(aa == mx, col, N), axis=-1, keepdims=True)
            acc_rows = (first_max == rows1).astype(jnp.float32)    # (N, 1)

            l = jnp.mean(loss_rows, keepdims=True)                 # (1, 1)
            a = jnp.mean(acc_rows, keepdims=True)
            loss_row = jnp.where(lane == (i - 1), l, loss_row)
            acc_row = jnp.where(lane == (i - 1), a, acc_row)

    # lane- and sublane-dense (8, 128) stats tile: row 0 = losses, row 1 = accuracies.
    st_ref[...] = jnp.concatenate(
        [loss_row, acc_row, jnp.zeros((6, 128), jnp.float32)], axis=0)


def crw_fused_call(patches, w_conv_bd, b_conv_t, w_head_pool, b_head, *, T, N):
    B, TN, PK = patches.shape
    PC, Co = w_head_pool.shape
    kernel = functools.partial(_crw_kernel, T=T, N=N)
    return pl.pallas_call(
        kernel,
        out_shape=(jax.ShapeDtypeStruct((B, TN, Co), jnp.float32),
                   jax.ShapeDtypeStruct((B, 8, 128), jnp.float32)),
        grid=(B,),
        in_specs=[
            pl.BlockSpec((None, TN, PK), lambda b: (b, 0, 0)),
            pl.BlockSpec((PK, PC), lambda b: (0, 0)),
            pl.BlockSpec((1, PC), lambda b: (0, 0)),
            pl.BlockSpec((PC, Co), lambda b: (0, 0)),
            pl.BlockSpec((1, Co), lambda b: (0, 0)),
        ],
        out_specs=(pl.BlockSpec((None, TN, Co), lambda b: (b, 0, 0)),
                   pl.BlockSpec((None, 8, 128), lambda b: (b, 0, 0))),
        compiler_params=pltpu.CompilerParams(
            dimension_semantics=("parallel",)),
    )(patches, w_conv_bd, b_conv_t, w_head_pool, b_head)


# ----------------------------------------------------------------------------
# Glue: im2col for the synthetic 3x3 / stride-2 / pad-1 encoder conv
# ----------------------------------------------------------------------------
def im2col_nhwc(x, k=3, s=2, p=1):
    M, H, W, C = x.shape
    xp = jnp.pad(x, ((0, 0), (p, p), (p, p), (0, 0)))
    Ho = (H + 2 * p - k) // s + 1
    Wo = (W + 2 * p - k) // s + 1
    cols = []
    for di in range(k):
        for dj in range(k):
            cols.append(xp[:, di:di + s * (Ho - 1) + 1:s,
                           dj:dj + s * (Wo - 1) + 1:s, :])
    patches = jnp.concatenate(cols, axis=-1)                       # (M, Ho, Wo, k*k*C)
    return patches, Ho, Wo


# ----------------------------------------------------------------------------
# CRW forward (flip=False, sk_targets=False, dropout=featdrop=0, vis=None)
# ----------------------------------------------------------------------------
def crw_forward(x, params):
    B, T, NC, H, W = x.shape
    N, Cin = NC // 3, 3

    # Frames in (b, t, n) row order, NHWC, so the kernel's q rows are already
    # (T, N)-ordered and no transpose sits between encode and walk.
    x6 = x.reshape(B, T, N, Cin, H, W)
    frames = jnp.transpose(x6, (0, 1, 2, 4, 5, 3)).reshape(B * T * N, H, W, Cin)

    # im2col stays in the wrapper (a few hundred KB at these sizes); for large H/W
    # it should move into the kernel via strided DMA slices to cut HBM traffic.
    patches, Ho, Wo = im2col_nhwc(frames, k=3, s=2, p=1)
    P = Ho * Wo
    K = patches.shape[-1]
    w_conv, b_conv = params["w_conv"], params["b_conv"]
    w_head, b_head = params["w_head"], params["b_head"]
    Cenc, Co = w_conv.shape[-1], w_head.shape[-1]
    Kpad = 32 * ((K + 31) // 32)                   # lane-dense sub-tile per window

    # Pack all P pooling windows of one (t, n) frame into a single P*Kpad-lane row.
    patches = patches.reshape(B * T * N, P, K)
    patches = jnp.pad(patches, ((0, 0), (0, 0), (0, Kpad - K)))
    patches = patches.reshape(B, T * N, P * Kpad)

    # Fused weights: block-diagonal conv weight, tiled bias, pool-folded head weight.
    w_conv_p = jnp.pad(w_conv, ((0, Kpad - K), (0, 0)))                    # (Kpad, Cenc)
    w_conv_bd = jnp.kron(jnp.eye(P, dtype=w_conv.dtype), w_conv_p)         # (P*Kpad, P*Cenc)
    b_conv_t = jnp.tile(b_conv.reshape(1, Cenc), (1, P))                   # (1, P*Cenc)
    w_head_pool = jnp.tile(w_head, (P, 1)) / P                             # (P*Cenc, Co)
    b_head_r = b_head.reshape(1, Co)

    q_flat, stats = crw_fused_call(patches, w_conv_bd, b_conv_t,
                                   w_head_pool, b_head_r, T=T, N=N)

    q_btnc = q_flat.reshape(B, T, N, Co)
    q = jnp.transpose(q_btnc, (0, 3, 1, 2))        # (B, C, T, N)  torch layout

    diags = {}
    xents = [jnp.asarray(0.0, jnp.float32)]
    for i in range(1, T - 1):
        li = jnp.mean(stats[:, 0, i - 1])          # mean over batch
        ai = jnp.mean(stats[:, 1, i - 1])
        diags[f"{H} xent cyc r{i}"] = li
        diags[f"{H} acc cyc r{i}"] = ai
        xents.append(li)

    loss = sum(xents) / max(1, len(xents) - 1)
    # TODO(synk): sinkhorn_knopp targets (sk_targets=True), edge/feature dropout
    # with rate > 0, and the visualization paths are not implemented.
    return q, loss, diags


if __name__ == "__main__":
    key = jax.random.PRNGKey(0)
    k1, k2, k3, k4 = jax.random.split(key, 4)

    B, T, Np, H, W = 2, 4, 16, 8, 8        # x: B x T x (N*3) x H x W
    ENC, OUT = 32, 128                     # encoder hidden dim, head output dim

    x = jax.random.normal(k1, (B, T, Np * 3, H, W), dtype=jnp.float32)
    params = dict(
        w_conv=0.1 * jax.random.normal(k2, (3 * 3 * 3, ENC), dtype=jnp.float32),
        b_conv=0.01 * jnp.ones((1, ENC), dtype=jnp.float32),
        w_head=0.1 * jax.random.normal(k3, (ENC, OUT), dtype=jnp.float32),
        b_head=0.05 * jax.random.normal(k4, (1, OUT), dtype=jnp.float32),
    )

    fwd = jax.jit(crw_forward)
    q, loss, diags = fwd(x, params)
    jax.block_until_ready((q, loss, diags))

    assert q.shape == (B, OUT, T, Np)
    assert jnp.isfinite(loss)
    print("KERNEL_OK")
</pallas_src>

<mosaic_0001>
module attributes {stable_mosaic.version = 11 : i64} {
  func.func @_crw_kernel(%arg0: i32, %arg1: memref<1x64x512xf32, #tpu.memory_space<vmem>>, %arg2: memref<512x512xf32, #tpu.memory_space<vmem>>, %arg3: memref<1x512xf32, #tpu.memory_space<vmem>>, %arg4: memref<512x128xf32, #tpu.memory_space<vmem>>, %arg5: memref<1x128xf32, #tpu.memory_space<vmem>>, %arg6: memref<1x64x128xf32, #tpu.memory_space<vmem>>, %arg7: memref<1x8x128xf32, #tpu.memory_space<vmem>>) attributes {dimension_semantics = [#tpu.dimension_semantics<parallel>], iteration_bounds = array<i64: 2>, scalar_prefetch = 0 : i64, scratch_operands = 0 : i64, tpu.core_type = #tpu.core_type<tc>, window_params = [{transform_indices = @transform_0, window_bounds = array<i64: 1, 64, 512>}, {pipeline_mode = #tpu.pipeline_mode<synchronous>, transform_indices = @transform_1, window_bounds = array<i64: 512, 512>}, {pipeline_mode = #tpu.pipeline_mode<synchronous>, transform_indices = @transform_2, window_bounds = array<i64: 1, 512>}, {pipeline_mode = #tpu.pipeline_mode<synchronous>, transform_indices = @transform_3, window_bounds = array<i64: 512, 128>}, {pipeline_mode = #tpu.pipeline_mode<synchronous>, transform_indices = @transform_4, window_bounds = array<i64: 1, 128>}, {transform_indices = @transform_5, window_bounds = array<i64: 1, 64, 128>}, {transform_indices = @transform_6, window_bounds = array<i64: 1, 8, 128>}]} {
    %c0 = arith.constant 0 : index
    %c0_0 = arith.constant 0 : index
    %c0_1 = arith.constant 0 : index
    %0 = vector.load %arg1[%c0, %c0_0, %c0_1] : memref<1x64x512xf32, #tpu.memory_space<vmem>>, vector<1x64x512xf32>
    %1 = vector.shape_cast %0 : vector<1x64x512xf32> to vector<64x512xf32>
    %c0_2 = arith.constant 0 : index
    %c0_3 = arith.constant 0 : index
    %2 = vector.load %arg2[%c0_2, %c0_3] : memref<512x512xf32, #tpu.memory_space<vmem>>, vector<512x512xf32>
    %cst = arith.constant dense<0.000000e+00> : vector<64x512xf32>
    %3 = tpu.matmul %1, %2, %cst {dimension_numbers = #tpu.dot_dimension_numbers<[1], [0], [0], [1], [0, 0, 1, 1], [], []>} : vector<64x512xf32>, vector<512x512xf32>, vector<64x512xf32> -> vector<64x512xf32>
    %c0_4 = arith.constant 0 : index
    %c0_5 = arith.constant 0 : index
    %4 = vector.load %arg3[%c0_4, %c0_5] : memref<1x512xf32, #tpu.memory_space<vmem>>, vector<1x512xf32>
    %5 = vector.broadcast %4 : vector<1x512xf32> to vector<64x512xf32>
    %6 = arith.addf %3, %5 : vector<64x512xf32>
    %cst_6 = arith.constant 0.000000e+00 : f32
    %7 = vector.broadcast %cst_6 : f32 to vector<64x512xf32>
    %8 = arith.maximumf %6, %7 : vector<64x512xf32>
    %c0_7 = arith.constant 0 : index
    %c0_8 = arith.constant 0 : index
    %9 = vector.load %arg4[%c0_7, %c0_8] : memref<512x128xf32, #tpu.memory_space<vmem>>, vector<512x128xf32>
    %cst_9 = arith.constant dense<0.000000e+00> : vector<64x128xf32>
    %10 = tpu.matmul %8, %9, %cst_9 {dimension_numbers = #tpu.dot_dimension_numbers<[1], [0], [0], [1], [0, 0, 1, 1], [], []>} : vector<64x512xf32>, vector<512x128xf32>, vector<64x128xf32> -> vector<64x128xf32>
    %c0_10 = arith.constant 0 : index
    %c0_11 = arith.constant 0 : index
    %11 = vector.load %arg5[%c0_10, %c0_11] : memref<1x128xf32, #tpu.memory_space<vmem>>, vector<1x128xf32>
    %12 = vector.broadcast %11 : vector<1x128xf32> to vector<64x128xf32>
    %13 = arith.addf %10, %12 : vector<64x128xf32>
    %14 = arith.mulf %13, %13 : vector<64x128xf32>
    %cst_12 = arith.constant dense<0.000000e+00> : vector<64xf32>
    %15 = vector.multi_reduction <add>, %14, %cst_12 [1] : vector<64x128xf32> to vector<64xf32>
    %16 = vector.shape_cast %15 : vector<64xf32> to vector<64x1xf32>
    %cst_13 = arith.constant 1.000000e-24 : f32
    %17 = vector.broadcast %cst_13 : f32 to vector<64x1xf32>
    %18 = arith.maximumf %16, %17 : vector<64x1xf32>
    %19 = math.rsqrt %18 : vector<64x1xf32>
    %20 = vector.broadcast %19 : vector<64x1xf32> to vector<64x128xf32>
    %21 = arith.mulf %13, %20 : vector<64x128xf32>
    %c0_14 = arith.constant 0 : index
    %c0_15 = arith.constant 0 : index
    %c0_16 = arith.constant 0 : index
    %22 = vector.load %arg6[%c0_14, %c0_15, %c0_16] : memref<1x64x128xf32, #tpu.memory_space<vmem>>, vector<1x64x128xf32>
    %23 = vector.shape_cast %22 : vector<1x64x128xf32> to vector<64x128xf32>
    %24 = vector.shape_cast %21 : vector<64x128xf32> to vector<1x64x128xf32>
    tpu.vector_store %arg6[%c0_14, %c0_15, %c0_16], %24 {strides = array<i32>} : memref<1x64x128xf32, #tpu.memory_space<vmem>>, vector<1x64x128xf32>,
    %25 = arith.truncf %21 : vector<64x128xf32> to vector<64x128xbf16>
    %cst_17 = arith.constant dense<0.000000e+00> : vector<64x64xf32>
    %26 = tpu.matmul %25, %25, %cst_17 {dimension_numbers = #tpu.dot_dimension_numbers<[1], [1], [0], [0], [0, 0, 1, 0], [], []>} : vector<64x128xbf16>, vector<64x128xbf16>, vector<64x64xf32> -> vector<64x64xf32>
    %cst_18 = arith.constant 14.2857141 : f32
    %27 = vector.broadcast %cst_18 : f32 to vector<64x64xf32>
    %28 = arith.mulf %26, %27 : vector<64x64xf32>
    %29 = vector.extract_strided_slice %28 {offsets = [0, 16], sizes = [16, 16], strides = [1, 1]} : vector<64x64xf32> to vector<16x16xf32>
    %cst_19 = arith.constant dense<0xFF800000> : vector<16xf32>
    %30 = vector.multi_reduction <maximumf>, %29, %cst_19 [1] : vector<16x16xf32> to vector<16xf32>
    %31 = vector.shape_cast %30 : vector<16xf32> to vector<16x1xf32>
    %32 = vector.broadcast %31 : vector<16x1xf32> to vector<16x16xf32>
    %33 = arith.subf %29, %32 : vector<16x16xf32>
    %34 = math.exp %33 : vector<16x16xf32>
    %cst_20 = arith.constant dense<0.000000e+00> : vector<16xf32>
    %35 = vector.multi_reduction <add>, %34, %cst_20 [1] : vector<16x16xf32> to vector<16xf32>
    %36 = vector.shape_cast %35 : vector<16xf32> to vector<16x1xf32>
    %37 = vector.broadcast %36 : vector<16x1xf32> to vector<16x16xf32>
    %38 = arith.divf %34, %37 : vector<16x16xf32>
    %39 = vector.extract_strided_slice %28 {offsets = [16, 0], sizes = [16, 16], strides = [1, 1]} : vector<64x64xf32> to vector<16x16xf32>
    %cst_21 = arith.constant dense<0xFF800000> : vector<16xf32>
    %40 = vector.multi_reduction <maximumf>, %39, %cst_21 [1] : vector<16x16xf32> to vector<16xf32>
    %41 = vector.shape_cast %40 : vector<16xf32> to vector<16x1xf32>
    %42 = vector.broadcast %41 : vector<16x1xf32> to vector<16x16xf32>
    %43 = arith.subf %39, %42 : vector<16x16xf32>
    %44 = math.exp %43 : vector<16x16xf32>
    %cst_22 = arith.constant dense<0.000000e+00> : vector<16xf32>
    %45 = vector.multi_reduction <add>, %44, %cst_22 [1] : vector<16x16xf32> to vector<16xf32>
    %46 = vector.shape_cast %45 : vector<16xf32> to vector<16x1xf32>
    %47 = vector.broadcast %46 : vector<16x1xf32> to vector<16x16xf32>
    %48 = arith.divf %44, %47 : vector<16x16xf32>
    %49 = vector.extract_strided_slice %28 {offsets = [16, 32], sizes = [16, 16], strides = [1, 1]} : vector<64x64xf32> to vector<16x16xf32>
    %cst_23 = arith.constant dense<0xFF800000> : vector<16xf32>
    %50 = vector.multi_reduction <maximumf>, %49, %cst_23 [1] : vector<16x16xf32> to vector<16xf32>
    %51 = vector.shape_cast %50 : vector<16xf32> to vector<16x1xf32>
    %52 = vector.broadcast %51 : vector<16x1xf32> to vector<16x16xf32>
    %53 = arith.subf %49, %52 : vector<16x16xf32>
    %54 = math.exp %53 : vector<16x16xf32>
    %cst_24 = arith.constant dense<0.000000e+00> : vector<16xf32>
    %55 = vector.multi_reduction <add>, %54, %cst_24 [1] : vector<16x16xf32> to vector<16xf32>
    %56 = vector.shape_cast %55 : vector<16xf32> to vector<16x1xf32>
    %57 = vector.broadcast %56 : vector<16x1xf32> to vector<16x16xf32>
    %58 = arith.divf %54, %57 : vector<16x16xf32>
    %59 = vector.extract_strided_slice %28 {offsets = [32, 16], sizes = [16, 16], strides = [1, 1]} : vector<64x64xf32> to vector<16x16xf32>
    %cst_25 = arith.constant dense<0xFF800000> : vector<16xf32>
    %60 = vector.multi_reduction <maximumf>, %59, %cst_25 [1] : vector<16x16xf32> to vector<16xf32>
    %61 = vector.shape_cast %60 : vector<16xf32> to vector<16x1xf32>
    %62 = vector.broadcast %61 : vector<16x1xf32> to vector<16x16xf32>
    %63 = arith.subf %59, %62 : vector<16x16xf32>
    %64 = math.exp %63 : vector<16x16xf32>
    %cst_26 = arith.constant dense<0.000000e+00> : vector<16xf32>
    %65 = vector.multi_reduction <add>, %64, %cst_26 [1] : vector<16x16xf32> to vector<16xf32>
    %66 = vector.shape_cast %65 : vector<16xf32> to vector<16x1xf32>
    %67 = vector.broadcast %66 : vector<16x1xf32> to vector<16x16xf32>
    %68 = arith.divf %64, %67 : vector<16x16xf32>
    %69 = vector.extract_strided_slice %28 {offsets = [32, 48], sizes = [16, 16], strides = [1, 1]} : vector<64x64xf32> to vector<16x16xf32>
    %cst_27 = arith.constant dense<0xFF800000> : vector<16xf32>
    %70 = vector.multi_reduction <maximumf>, %69, %cst_27 [1] : vector<16x16xf32> to vector<16xf32>
    %71 = vector.shape_cast %70 : vector<16xf32> to vector<16x1xf32>
    %72 = vector.broadcast %71 : vector<16x1xf32> to vector<16x16xf32>
    %73 = arith.subf %69, %72 : vector<16x16xf32>
    %74 = math.exp %73 : vector<16x16xf32>
    %cst_28 = arith.constant dense<0.000000e+00> : vector<16xf32>
    %75 = vector.multi_reduction <add>, %74, %cst_28 [1] : vector<16x16xf32> to vector<16xf32>
    %76 = vector.shape_cast %75 : vector<16xf32> to vector<16x1xf32>
    %77 = vector.broadcast %76 : vector<16x1xf32> to vector<16x16xf32>
    %78 = arith.divf %74, %77 : vector<16x16xf32>
    %79 = vector.extract_strided_slice %28 {offsets = [48, 32], sizes = [16, 16], strides = [1, 1]} : vector<64x64xf32> to vector<16x16xf32>
    %cst_29 = arith.constant dense<0xFF800000> : vector<16xf32>
    %80 = vector.multi_reduction <maximumf>, %79, %cst_29 [1] : vector<16x16xf32> to vector<16xf32>
    %81 = vector.shape_cast %80 : vector<16xf32> to vector<16x1xf32>
    %82 = vector.broadcast %81 : vector<16x1xf32> to vector<16x16xf32>
    %83 = arith.subf %79, %82 : vector<16x16xf32>
    %84 = math.exp %83 : vector<16x16xf32>
    %cst_30 = arith.constant dense<0.000000e+00> : vector<16xf32>
    %85 = vector.multi_reduction <add>, %84, %cst_30 [1] : vector<16x16xf32> to vector<16xf32>
    %86 = vector.shape_cast %85 : vector<16xf32> to vector<16x1xf32>
    %87 = vector.broadcast %86 : vector<16x1xf32> to vector<16x16xf32>
    %88 = arith.divf %84, %87 : vector<16x16xf32>
    %89 = tpu.iota {dimensions = array<i32: 0>} : vector<16x16xi32>
    %90 = tpu.iota {dimensions = array<i32: 1>} : vector<16x16xi32>
    %91 = tpu.iota {dimensions = array<i32: 0>} : vector<16x1xi32>
    %92 = tpu.iota {dimensions = array<i32: 1>} : vector<1x128xi32>
    %cst_31 = arith.constant 0.000000e+00 : f32
    %93 = vector.broadcast %cst_31 : f32 to vector<1x128xf32>
    %cst_32 = arith.constant 0.000000e+00 : f32
    %94 = vector.broadcast %cst_32 : f32 to vector<1x128xf32>
    %cst_33 = arith.constant dense<0.000000e+00> : vector<16x16xf32>
    %95 = tpu.matmul %38, %58, %cst_33 {dimension_numbers = #tpu.dot_dimension_numbers<[1], [0], [0], [1], [0, 0, 1, 1], [], []>} : vector<16x16xf32>, vector<16x16xf32>, vector<16x16xf32> -> vector<16x16xf32>
    %cst_34 = arith.constant dense<0.000000e+00> : vector<16x16xf32>
    %96 = tpu.matmul %68, %48, %cst_34 {dimension_numbers = #tpu.dot_dimension_numbers<[1], [0], [0], [1], [0, 0, 1, 1], [], []>} : vector<16x16xf32>, vector<16x16xf32>, vector<16x16xf32> -> vector<16x16xf32>
    %cst_35 = arith.constant dense<0.000000e+00> : vector<16x16xf32>
    %97 = tpu.matmul %95, %96, %cst_35 {dimension_numbers = #tpu.dot_dimension_numbers<[1], [0], [0], [1], [0, 0, 1, 1], [], []>} : vector<16x16xf32>, vector<16x16xf32>, vector<16x16xf32> -> vector<16x16xf32>
    %cst_36 = arith.constant dense<0.000000e+00> : vector<16xf32>
    %98 = vector.multi_reduction <add>, %97, %cst_36 [1] : vector<16x16xf32> to vector<16xf32>
    %99 = vector.shape_cast %98 : vector<16xf32> to vector<16x1xf32>
    %cst_37 = arith.constant 1.600000e-19 : f32
    %100 = vector.broadcast %cst_37 : f32 to vector<16x1xf32>
    %101 = arith.addf %99, %100 : vector<16x1xf32>
    %102 = math.log %101 : vector<16x1xf32>
    %103 = arith.cmpi eq, %89, %90 : vector<16x16xi32>
    %cst_38 = arith.constant 0.000000e+00 : f32
    %104 = vector.broadcast %cst_38 : f32 to vector<16x16xf32>
    %105 = arith.select %103, %97, %104 : vector<16x16xi1>, vector<16x16xf32>
    %cst_39 = arith.constant dense<0.000000e+00> : vector<16xf32>
    %106 = vector.multi_reduction <add>, %105, %cst_39 [1] : vector<16x16xf32> to vector<16xf32>
    %107 = vector.shape_cast %106 : vector<16xf32> to vector<16x1xf32>
    %cst_40 = arith.constant 9.99999968E-21 : f32
    %108 = vector.broadcast %cst_40 : f32 to vector<16x1xf32>
    %109 = arith.addf %107, %108 : vector<16x1xf32>
    %110 = math.log %109 : vector<16x1xf32>
    %111 = arith.subf %102, %110 : vector<16x1xf32>
    %cst_41 = arith.constant dense<0xFF800000> : vector<16xf32>
    %112 = vector.multi_reduction <maximumf>, %97, %cst_41 [1] : vector<16x16xf32> to vector<16xf32>
    %113 = vector.shape_cast %112 : vector<16xf32> to vector<16x1xf32>
    %114 = vector.broadcast %113 : vector<16x1xf32> to vector<16x16xf32>
    %115 = arith.cmpf oeq, %97, %114 : vector<16x16xf32>
    %c16_i32 = arith.constant 16 : i32
    %116 = vector.broadcast %c16_i32 : i32 to vector<16x16xi32>
    %117 = arith.select %115, %90, %116 : vector<16x16xi1>, vector<16x16xi32>
    %cst_42 = arith.constant dense<2147483647> : vector<16xi32>
    %118 = vector.multi_reduction <minsi>, %117, %cst_42 [1] : vector<16x16xi32> to vector<16xi32>
    %119 = vector.shape_cast %118 : vector<16xi32> to vector<16x1xi32>
    %120 = arith.cmpi eq, %119, %91 : vector<16x1xi32>
    %121 = arith.extui %120 : vector<16x1xi1> to vector<16x1xi32>
    %122 = arith.sitofp %121 : vector<16x1xi32> to vector<16x1xf32>
    %123 = vector.shape_cast %111 : vector<16x1xf32> to vector<1x16x1xf32>
    %cst_43 = arith.constant dense<0.000000e+00> : vector<1xf32>
    %124 = vector.multi_reduction <add>, %123, %cst_43 [1, 2] : vector<1x16x1xf32> to vector<1xf32>
    %125 = vector.shape_cast %124 : vector<1xf32> to vector<1x1x1xf32>
    %126 = vector.extract %125[0, 0, 0] : f32 from vector<1x1x1xf32>
    %127 = vector.broadcast %126 : f32 to vector<1x1xf32>
    %cst_44 = arith.constant 1.600000e+01 : f32
    %128 = vector.broadcast %cst_44 : f32 to vector<1x1xf32>
    %129 = arith.divf %127, %128 : vector<1x1xf32>
    %130 = vector.shape_cast %122 : vector<16x1xf32> to vector<1x16x1xf32>
    %cst_45 = arith.constant dense<0.000000e+00> : vector<1xf32>
    %131 = vector.multi_reduction <add>, %130, %cst_45 [1, 2] : vector<1x16x1xf32> to vector<1xf32>
    %132 = vector.shape_cast %131 : vector<1xf32> to vector<1x1x1xf32>
    %133 = vector.extract %132[0, 0, 0] : f32 from vector<1x1x1xf32>
    %134 = vector.broadcast %133 : f32 to vector<1x1xf32>
    %cst_46 = arith.constant 1.600000e+01 : f32
    %135 = vector.broadcast %cst_46 : f32 to vector<1x1xf32>
    %136 = arith.divf %134, %135 : vector<1x1xf32>
    %c0_i32 = arith.constant 0 : i32
    %137 = vector.broadcast %c0_i32 : i32 to vector<1x128xi32>
    %138 = arith.cmpi eq, %92, %137 : vector<1x128xi32>
    %139 = vector.shape_cast %129 : vector<1x1xf32> to vector<1x1xf32>
    %140 = vector.broadcast %139 : vector<1x1xf32> to vector<1x128xf32>
    %141 = arith.select %138, %140, %93 : vector<1x128xi1>, vector<1x128xf32>
    %c0_i32_47 = arith.constant 0 : i32
    %142 = vector.broadcast %c0_i32_47 : i32 to vector<1x128xi32>
    %143 = arith.cmpi eq, %92, %142 : vector<1x128xi32>
    %144 = vector.shape_cast %136 : vector<1x1xf32> to vector<1x1xf32>
    %145 = vector.broadcast %144 : vector<1x1xf32> to vector<1x128xf32>
    %146 = arith.select %143, %145, %94 : vector<1x128xi1>, vector<1x128xf32>
    %cst_48 = arith.constant dense<0.000000e+00> : vector<16x16xf32>
    %147 = tpu.matmul %95, %78, %cst_48 {dimension_numbers = #tpu.dot_dimension_numbers<[1], [0], [0], [1], [0, 0, 1, 1], [], []>} : vector<16x16xf32>, vector<16x16xf32>, vector<16x16xf32> -> vector<16x16xf32>
    %cst_49 = arith.constant dense<0.000000e+00> : vector<16x16xf32>
    %148 = tpu.matmul %88, %96, %cst_49 {dimension_numbers = #tpu.dot_dimension_numbers<[1], [0], [0], [1], [0, 0, 1, 1], [], []>} : vector<16x16xf32>, vector<16x16xf32>, vector<16x16xf32> -> vector<16x16xf32>
    %cst_50 = arith.constant dense<0.000000e+00> : vector<16x16xf32>
    %149 = tpu.matmul %147, %148, %cst_50 {dimension_numbers = #tpu.dot_dimension_numbers<[1], [0], [0], [1], [0, 0, 1, 1], [], []>} : vector<16x16xf32>, vector<16x16xf32>, vector<16x16xf32> -> vector<16x16xf32>
    %cst_51 = arith.constant dense<0.000000e+00> : vector<16xf32>
    %150 = vector.multi_reduction <add>, %149, %cst_51 [1] : vector<16x16xf32> to vector<16xf32>
    %151 = vector.shape_cast %150 : vector<16xf32> to vector<16x1xf32>
    %cst_52 = arith.constant 1.600000e-19 : f32
    %152 = vector.broadcast %cst_52 : f32 to vector<16x1xf32>
    %153 = arith.addf %151, %152 : vector<16x1xf32>
    %154 = math.log %153 : vector<16x1xf32>
    %155 = arith.cmpi eq, %89, %90 : vector<16x16xi32>
    %cst_53 = arith.constant 0.000000e+00 : f32
    %156 = vector.broadcast %cst_53 : f32 to vector<16x16xf32>
    %157 = arith.select %155, %149, %156 : vector<16x16xi1>, vector<16x16xf32>
    %cst_54 = arith.constant dense<0.000000e+00> : vector<16xf32>
    %158 = vector.multi_reduction <add>, %157, %cst_54 [1] : vector<16x16xf32> to vector<16xf32>
    %159 = vector.shape_cast %158 : vector<16xf32> to vector<16x1xf32>
    %cst_55 = arith.constant 9.99999968E-21 : f32
    %160 = vector.broadcast %cst_55 : f32 to vector<16x1xf32>
    %161 = arith.addf %159, %160 : vector<16x1xf32>
    %162 = math.log %161 : vector<16x1xf32>
    %163 = arith.subf %154, %162 : vector<16x1xf32>
    %cst_56 = arith.constant dense<0xFF800000> : vector<16xf32>
    %164 = vector.multi_reduction <maximumf>, %149, %cst_56 [1] : vector<16x16xf32> to vector<16xf32>
    %165 = vector.shape_cast %164 : vector<16xf32> to vector<16x1xf32>
    %166 = vector.broadcast %165 : vector<16x1xf32> to vector<16x16xf32>
    %167 = arith.cmpf oeq, %149, %166 : vector<16x16xf32>
    %c16_i32_57 = arith.constant 16 : i32
    %168 = vector.broadcast %c16_i32_57 : i32 to vector<16x16xi32>
    %169 = arith.select %167, %90, %168 : vector<16x16xi1>, vector<16x16xi32>
    %cst_58 = arith.constant dense<2147483647> : vector<16xi32>
    %170 = vector.multi_reduction <minsi>, %169, %cst_58 [1] : vector<16x16xi32> to vector<16xi32>
    %171 = vector.shape_cast %170 : vector<16xi32> to vector<16x1xi32>
    %172 = arith.cmpi eq, %171, %91 : vector<16x1xi32>
    %173 = arith.extui %172 : vector<16x1xi1> to vector<16x1xi32>
    %174 = arith.sitofp %173 : vector<16x1xi32> to vector<16x1xf32>
    %175 = vector.shape_cast %163 : vector<16x1xf32> to vector<1x16x1xf32>
    %cst_59 = arith.constant dense<0.000000e+00> : vector<1xf32>
    %176 = vector.multi_reduction <add>, %175, %cst_59 [1, 2] : vector<1x16x1xf32> to vector<1xf32>
    %177 = vector.shape_cast %176 : vector<1xf32> to vector<1x1x1xf32>
    %178 = vector.extract %177[0, 0, 0] : f32 from vector<1x1x1xf32>
    %179 = vector.broadcast %178 : f32 to vector<1x1xf32>
    %cst_60 = arith.constant 1.600000e+01 : f32
    %180 = vector.broadcast %cst_60 : f32 to vector<1x1xf32>
    %181 = arith.divf %179, %180 : vector<1x1xf32>
    %182 = vector.shape_cast %174 : vector<16x1xf32> to vector<1x16x1xf32>
    %cst_61 = arith.constant dense<0.000000e+00> : vector<1xf32>
    %183 = vector.multi_reduction <add>, %182, %cst_61 [1, 2] : vector<1x16x1xf32> to vector<1xf32>
    %184 = vector.shape_cast %183 : vector<1xf32> to vector<1x1x1xf32>
    %185 = vector.extract %184[0, 0, 0] : f32 from vector<1x1x1xf32>
    %186 = vector.broadcast %185 : f32 to vector<1x1xf32>
    %cst_62 = arith.constant 1.600000e+01 : f32
    %187 = vector.broadcast %cst_62 : f32 to vector<1x1xf32>
    %188 = arith.divf %186, %187 : vector<1x1xf32>
    %c1_i32 = arith.constant 1 : i32
    %189 = vector.broadcast %c1_i32 : i32 to vector<1x128xi32>
    %190 = arith.cmpi eq, %92, %189 : vector<1x128xi32>
    %191 = vector.shape_cast %181 : vector<1x1xf32> to vector<1x1xf32>
    %192 = vector.broadcast %191 : vector<1x1xf32> to vector<1x128xf32>
    %193 = arith.select %190, %192, %141 : vector<1x128xi1>, vector<1x128xf32>
    %c1_i32_63 = arith.constant 1 : i32
    %194 = vector.broadcast %c1_i32_63 : i32 to vector<1x128xi32>
    %195 = arith.cmpi eq, %92, %194 : vector<1x128xi32>
    %196 = vector.shape_cast %188 : vector<1x1xf32> to vector<1x1xf32>
    %197 = vector.broadcast %196 : vector<1x1xf32> to vector<1x128xf32>
    %198 = arith.select %195, %197, %146 : vector<1x128xi1>, vector<1x128xf32>
    %cst_64 = arith.constant 0.000000e+00 : f32
    %199 = vector.broadcast %cst_64 : f32 to vector<6x128xf32>
    %200 = tpu.concatenate %193, %198, %199 in 0 : vector<1x128xf32>, vector<1x128xf32>, vector<6x128xf32> -> vector<8x128xf32>
    %c0_65 = arith.constant 0 : index
    %c0_66 = arith.constant 0 : index
    %c0_67 = arith.constant 0 : index
    %201 = vector.load %arg7[%c0_65, %c0_66, %c0_67] : memref<1x8x128xf32, #tpu.memory_space<vmem>>, vector<1x8x128xf32>
    %202 = vector.shape_cast %201 : vector<1x8x128xf32> to vector<8x128xf32>
    %203 = vector.shape_cast %200 : vector<8x128xf32> to vector<1x8x128xf32>
    tpu.vector_store %arg7[%c0_65, %c0_66, %c0_67], %203 {strides = array<i32>} : memref<1x8x128xf32, #tpu.memory_space<vmem>>, vector<1x8x128xf32>,
    return
  }
  func.func @transform_0(%arg0: i32) -> (i32, i32, i32) {
    %c0_i32 = arith.constant 0 : i32
    %c0_i32_0 = arith.constant 0 : i32
    %c0_i32_1 = arith.constant 0 : i32
    return %arg0, %c0_i32, %c0_i32_0 : i32, i32, i32
  }
  func.func @transform_1(%arg0: i32) -> (i32, i32) {
    %c0_i32 = arith.constant 0 : i32
    %c0_i32_0 = arith.constant 0 : i32
    %c0_i32_1 = arith.constant 0 : i32
    return %c0_i32, %c0_i32_0 : i32, i32
  }
  func.func @transform_2(%arg0: i32) -> (i32, i32) {
    %c0_i32 = arith.constant 0 : i32
    %c0_i32_0 = arith.constant 0 : i32
    %c0_i32_1 = arith.constant 0 : i32
    return %c0_i32, %c0_i32_0 : i32, i32
  }
  func.func @transform_3(%arg0: i32) -> (i32, i32) {
    %c0_i32 = arith.constant 0 : i32
    %c0_i32_0 = arith.constant 0 : i32
    %c0_i32_1 = arith.constant 0 : i32
    return %c0_i32, %c0_i32_0 : i32, i32
  }
  func.func @transform_4(%arg0: i32) -> (i32, i32) {
    %c0_i32 = arith.constant 0 : i32
    %c0_i32_0 = arith.constant 0 : i32
    %c0_i32_1 = arith.constant 0 : i32
    return %c0_i32, %c0_i32_0 : i32, i32
  }
  func.func @transform_5(%arg0: i32) -> (i32, i32, i32) {
    %c0_i32 = arith.constant 0 : i32
    %c0_i32_0 = arith.constant 0 : i32
    %c0_i32_1 = arith.constant 0 : i32
    return %arg0, %c0_i32, %c0_i32_0 : i32, i32, i32
  }
  func.func @transform_6(%arg0: i32) -> (i32, i32, i32) {
    %c0_i32 = arith.constant 0 : i32
    %c0_i32_0 = arith.constant 0 : i32
    %c0_i32_1 = arith.constant 0 : i32
    return %arg0, %c0_i32, %c0_i32_0 : i32, i32, i32
  }
}

</mosaic_0001>

<llo_original>
// kernel: crw_forward.1
$region0: #{crw_forward.1}
  #allocation0 [shape = 'u32[]', space=smem, size = 0x4, offset = 0x4, fixed_abs, tag = 'smem constant byte address 0x4 - core index']
  #allocation1 [shape = 'u32[72,128]{1,0:T(1,128)}', space=vmem, size = 0x9000, scoped, tag = 'internal scratch']
  %s0 = inlined_call_operand.vmem [shape: f32[2,64,512], index: 0, kind: input, shape index: {}]
  %s1 = inlined_call_operand.vmem [shape: f32[512,512], index: 1, kind: input, shape index: {}]
  %s2 = inlined_call_operand.vmem [shape: f32[1,512], index: 2, kind: input, shape index: {}]
  %s3 = inlined_call_operand.vmem [shape: f32[512,128], index: 3, kind: input, shape index: {}]
  %s4 = inlined_call_operand.vmem [shape: f32[1,128], index: 4, kind: input, shape index: {}]
  %s5 = inlined_call_operand.hbm [shape: f32[2,64,128], index: 5, kind: output, shape index: {0}]
  %s6 = inlined_call_operand.vmem [shape: f32[2,8,128], index: 6, kind: output, shape index: {1}]
  %7 = xla_tuple %s5, %s6
  %s8 = sld [smem:[#allocation0]]
  $region61: #{crw_forward.1} parent=0
    _
  %s10 = ssub.s32 1, %s8
  %s11 = scalar_select 0, %s10, %s8
  $region1: #{crw_forward.1} parent=0
    #allocation2 [shape = 'u8[65536]{0}', space=vmem, size = 0x10000, scoped, tag = 'output window, operand 0']
    #allocation3 [shape = 's32[2]{0}', space=sflag, size = 0x8, scoped, tag = 'scoped memory for crw_forward.1']
    %12 = vsyncpa [#allocation3], 0
    %s13 = scalar_lea.sflag [#allocation3], 1
    %14 = vsyncpa %s13, 0
    loop: start=0, step=1, limit=4
    $region2: #{crw_forward.1} parent=1 // loop_pre_header
      _
    $region3: #{crw_forward.1} parent=1 // loop_header
      %s16 = sphi 0, %s20
      %p17 = scmp.ge.s32.totalorder %s16, 4
      %s26 = sphi 0, %s28
      %s29 = sphi 0, %s26
      %s30 = sphi 0, %s29
      %s46 = sphi 0, %s30
      %s50 = sphi 0, %s50
      %s52 = sphi 0, %s50
      %s53 = sphi 0, %s52
      %s67 = sphi 0, %s53
      %s71 = sphi 0, %s71
      %s73 = sphi 0, %s71
      %s74 = sphi 0, %s73
      %s88 = sphi 0, %s74
      %s92 = sphi 0, %s92
      %s94 = sphi 0, %s92
      %s95 = sphi 0, %s94
      %s109 = sphi 0, %s95
      %s113 = sphi 0, %s113
      %s115 = sphi 0, %s113
      %s116 = sphi 0, %s115
      %s130 = sphi 0, %s116
      %s136 = sphi 0, %s138
      %s139 = sphi 0, %s136
      %s140 = sphi 0, %s139
      %s156 = sphi 0, %s140
      %s162 = sphi 0, %s164
      %s165 = sphi 0, %s162
      %s166 = sphi 0, %s165
      %s182 = sphi 0, %s166
    $region4: #{crw_forward.1} parent=1 // loop_header_branch
      %19 = sbr.rel (%p17) target = $region8
    $region5: #{crw_forward.1} parent=1 // loop_body
      %s21 = ssub.s32 %s16, 1
      %s22 = ssub.s32 %s16, 2
      %s23 = sadd.s32 %s16, 1
      %s24 = ssub.s32 %s16, %s23
      %p25 = scmp.eq.s32.totalorder %s24, 0
      %s27 = sadd.s32 %s26, 1
      %s28 = scalar_select %p25, %s26, %s27
      %p31 = pneg %p25
      %p32 = scmp.eq.s32.totalorder %s16, 1
      %p33 = por %p31, %p32
      %p34 = scmp.ne.s32.totalorder %s26, %s29
      %p35 = scmp.eq.s32.totalorder %s16, 0
      %p36 = por %p34, %p35
      %p37 = scmp.ne.s32.totalorder %s26, %s29
      %p38 = scmp.eq.s32.totalorder %s21, 1
      %p39 = por %p37, %p38
      %p40 = scmp.ne.s32.totalorder %s29, %s30
      %p41 = scmp.eq.s32.totalorder %s21, 0
      %p42 = por %p40, %p41
      %p43 = scmp.ne.s32.totalorder %s29, %s30
      %p44 = scmp.eq.s32.totalorder %s22, 1
      %p45 = por %p43, %p44
      %p47 = scmp.ne.s32.totalorder %s30, %s46
      %p48 = scmp.eq.s32.totalorder %s22, 0
      %p49 = por %p47, %p48
      %s51 = sadd.s32 %s50, 1
      %p54 = scmp.eq.s32.totalorder %s16, 1
      %p55 = scmp.ne.s32.totalorder %s50, %s52
      %p56 = scmp.eq.s32.totalorder %s16, 0
      %p57 = por %p55, %p56
      %p58 = scmp.ne.s32.totalorder %s50, %s52
      %p59 = scmp.eq.s32.totalorder %s21, 1
      %p60 = por %p58, %p59
      %p61 = scmp.ne.s32.totalorder %s52, %s53
      %p62 = scmp.eq.s32.totalorder %s21, 0
      %p63 = por %p61, %p62
      %p64 = scmp.ne.s32.totalorder %s52, %s53
      %p65 = scmp.eq.s32.totalorder %s22, 1
      %p66 = por %p64, %p65
      %p68 = scmp.ne.s32.totalorder %s53, %s67
      %p69 = scmp.eq.s32.totalorder %s22, 0
      %p70 = por %p68, %p69
      %s72 = sadd.s32 %s71, 1
      %p75 = scmp.eq.s32.totalorder %s16, 1
      %p76 = scmp.ne.s32.totalorder %s71, %s73
      %p77 = scmp.eq.s32.totalorder %s16, 0
      %p78 = por %p76, %p77
      %p79 = scmp.ne.s32.totalorder %s71, %s73
      %p80 = scmp.eq.s32.totalorder %s21, 1
      %p81 = por %p79, %p80
      %p82 = scmp.ne.s32.totalorder %s73, %s74
      %p83 = scmp.eq.s32.totalorder %s21, 0
      %p84 = por %p82, %p83
      %p85 = scmp.ne.s32.totalorder %s73, %s74
      %p86 = scmp.eq.s32.totalorder %s22, 1
      %p87 = por %p85, %p86
      %p89 = scmp.ne.s32.totalorder %s74, %s88
      %p90 = scmp.eq.s32.totalorder %s22, 0
      %p91 = por %p89, %p90
      %s93 = sadd.s32 %s92, 1
      %p96 = scmp.eq.s32.totalorder %s16, 1
      %p97 = scmp.ne.s32.totalorder %s92, %s94
      %p98 = scmp.eq.s32.totalorder %s16, 0
      %p99 = por %p97, %p98
      %p100 = scmp.ne.s32.totalorder %s92, %s94
      %p101 = scmp.eq.s32.totalorder %s21, 1
      %p102 = por %p100, %p101
      %p103 = scmp.ne.s32.totalorder %s94, %s95
      %p104 = scmp.eq.s32.totalorder %s21, 0
      %p105 = por %p103, %p104
      %p106 = scmp.ne.s32.totalorder %s94, %s95
      %p107 = scmp.eq.s32.totalorder %s22, 1
      %p108 = por %p106, %p107
      %p110 = scmp.ne.s32.totalorder %s95, %s109
      %p111 = scmp.eq.s32.totalorder %s22, 0
      %p112 = por %p110, %p111
      %s114 = sadd.s32 %s113, 1
      %p117 = scmp.eq.s32.totalorder %s16, 1
      %p118 = scmp.ne.s32.totalorder %s113, %s115
      %p119 = scmp.eq.s32.totalorder %s16, 0
      %p120 = por %p118, %p119
      %p121 = scmp.ne.s32.totalorder %s113, %s115
      %p122 = scmp.eq.s32.totalorder %s21, 1
      %p123 = por %p121, %p122
      %p124 = scmp.ne.s32.totalorder %s115, %s116
      %p125 = scmp.eq.s32.totalorder %s21, 0
      %p126 = por %p124, %p125
      %p127 = scmp.ne.s32.totalorder %s115, %s116
      %p128 = scmp.eq.s32.totalorder %s22, 1
      %p129 = por %p127, %p128
      %p131 = scmp.ne.s32.totalorder %s116, %s130
      %p132 = scmp.eq.s32.totalorder %s22, 0
      %p133 = por %p131, %p132
      %s134 = ssub.s32 %s16, %s23
      %p135 = scmp.eq.s32.totalorder %s134, 0
      %s137 = sadd.s32 %s136, 1
      %s138 = scalar_select %p135, %s136, %s137
      %p141 = pneg %p135
      %p142 = scmp.eq.s32.totalorder %s16, 1
      %p143 = por %p141, %p142
      %p144 = scmp.ne.s32.totalorder %s136, %s139
      %p145 = scmp.eq.s32.totalorder %s16, 0
      %p146 = por %p144, %p145
      %p147 = scmp.ne.s32.totalorder %s136, %s139
      %p148 = scmp.eq.s32.totalorder %s21, 1
      %p149 = por %p147, %p148
      %p150 = scmp.ne.s32.totalorder %s139, %s140
      %p151 = scmp.eq.s32.totalorder %s21, 0
      %p152 = por %p150, %p151
      %p153 = scmp.ne.s32.totalorder %s139, %s140
      %p154 = scmp.eq.s32.totalorder %s22, 1
      %p155 = por %p153, %p154
      %p157 = scmp.ne.s32.totalorder %s140, %s156
      %p158 = scmp.eq.s32.totalorder %s22, 0
      %p159 = por %p157, %p158
      %s160 = ssub.s32 %s16, %s23
      %p161 = scmp.eq.s32.totalorder %s160, 0
      %s163 = sadd.s32 %s162, 1
      %s164 = scalar_select %p161, %s162, %s163
      %p167 = pneg %p161
      %p168 = scmp.eq.s32.totalorder %s16, 1
      %p169 = por %p167, %p168
      %p170 = scmp.ne.s32.totalorder %s162, %s165
      %p171 = scmp.eq.s32.totalorder %s16, 0
      %p172 = por %p170, %p171
      %p173 = scmp.ne.s32.totalorder %s162, %s165
      %p174 = scmp.eq.s32.totalorder %s21, 1
      %p175 = por %p173, %p174
      %p176 = scmp.ne.s32.totalorder %s165, %s166
      %p177 = scmp.eq.s32.totalorder %s21, 0
      %p178 = por %p176, %p177
      %p179 = scmp.ne.s32.totalorder %s165, %s166
      %p180 = scmp.eq.s32.totalorder %s22, 1
      %p181 = por %p179, %p180
      %p183 = scmp.ne.s32.totalorder %s166, %s182
      %p184 = scmp.eq.s32.totalorder %s22, 0
      %p185 = por %p183, %p184
      %p186 = scmp.le.s32.totalorder 1, %s16
      %p187 = scmp.lt.s32.totalorder %s16, 3
      %p188 = pnand %p186, %p187
      %p189 = pneg %p188
      // Predicated region
      $region9: #{crw_forward.1} parent=5 // pred_check
        _
      $region10: #{crw_forward.1} parent=5 // pred_check_branch
        %191 = sbr.rel (%p188) target = $region12
      $region11: #{crw_forward.1} parent=5 // pred_region
        %s192 = ssub.s32 %s16, 1
        // Predicated region
        $region13: #{crw_forward.1} parent=11 // pred_check
          %p193 = pneg %p63
        $region14: #{crw_forward.1} parent=11 // pred_check_branch
          %195 = sbr.rel (%p193) target = $region16
        $region15: #{crw_forward.1} parent=11 // pred_region
          _
        $region16: #{crw_forward.1} parent=11 // pred_fallthru
          _
        // Predicated region
        $region17: #{crw_forward.1} parent=11 // pred_check
          %p196 = pneg %p84
        $region18: #{crw_forward.1} parent=11 // pred_check_branch
          %198 = sbr.rel (%p196) target = $region20
        $region19: #{crw_forward.1} parent=11 // pred_region
          _
        $region20: #{crw_forward.1} parent=11 // pred_fallthru
          _
        // Predicated region
        $region21: #{crw_forward.1} parent=11 // pred_check
          %p199 = pneg %p105
        $region22: #{crw_forward.1} parent=11 // pred_check_branch
          %201 = sbr.rel (%p199) target = $region24
        $region23: #{crw_forward.1} parent=11 // pred_region
          _
        $region24: #{crw_forward.1} parent=11 // pred_fallthru
          _
        // Predicated region
        $region25: #{crw_forward.1} parent=11 // pred_check
          %p202 = pneg %p126
        $region26: #{crw_forward.1} parent=11 // pred_check_branch
          %204 = sbr.rel (%p202) target = $region28
        $region27: #{crw_forward.1} parent=11 // pred_region
          _
        $region28: #{crw_forward.1} parent=11 // pred_fallthru
          _
      $region12: #{crw_forward.1} parent=5 // pred_fallthru
        _
      %p205 = scmp.lt.s32.totalorder %s16, 2
      // Predicated region
      $region29: #{crw_forward.1} parent=5 // pred_check
        %p206 = pneg %p205
      $region30: #{crw_forward.1} parent=5 // pred_check_branch
        %208 = sbr.rel (%p206) target = $region32
      $region31: #{crw_forward.1} parent=5 // pred_region
        // Predicated region
        $region33: #{crw_forward.1} parent=31 // pred_check
          %p209 = pneg %p36
        $region34: #{crw_forward.1} parent=31 // pred_check_branch
          %211 = sbr.rel (%p209) target = $region36
        $region35: #{crw_forward.1} parent=31 // pred_region
          %p212 = scmp.lt.s32.totalorder %s16, 1
          %s213 = scalar_select %p212, %s16, 1
          %s214 = smul.addr %s213, 32
          %s215 = smul.addr %s214, 8
          %s216 = scalar_lea.vmem %s0, %s215
        $region36: #{crw_forward.1} parent=31 // pred_fallthru
          _
      $region32: #{crw_forward.1} parent=5 // pred_fallthru
        _
      %p217 = scmp.le.s32.totalorder 1, %s16
      %p218 = scmp.lt.s32.totalorder %s16, 3
      %p219 = pnand %p217, %p218
      %p220 = pneg %p219
      // Predicated region
      $region37: #{crw_forward.1} parent=5 // pred_check
        _
      $region38: #{crw_forward.1} parent=5 // pred_check_branch
        %222 = sbr.rel (%p219) target = $region40
      $region39: #{crw_forward.1} parent=5 // pred_region
        %s223 = ssub.s32 %s16, 1
        %p224 = scmp.lt.s32.totalorder %s21, 1
        %s225 = scalar_select %p224, %s21, 1
        %s226 = smul.addr %s225, 32
        %s227 = smul.addr %s226, 8
        %s228 = scalar_lea.vmem %s0, %s227
        %p229 = pneg %p42
        %p230 = pneg %p39
        %p231 = pneg %p63
        %p232 = pneg %p60
        %p233 = pneg %p84
        %p234 = pneg %p81
        %p235 = pneg %p105
        %p236 = pneg %p102
        %p237 = pneg %p126
        %p238 = pneg %p123
        %p239 = pneg %p152
        %p240 = pneg %p149
        %s241 = sand.u32 %s139, 1
        %s242 = scalar_lea.sflag [#allocation3], %s241
        %s243 = sand.u32 %s139, 1
        %s244 = smul.addr %s243, 64
        %s245 = scalar_lea.vmem [#allocation2], %s244
        %p246 = pneg %p178
        %p247 = pneg %p175
        %p248 = scmp.lt.s32.totalorder %s21, 1
        %s249 = scalar_select %p248, %s21, 1
        %s250 = smul.addr %s249, 8
        %s251 = scalar_lea.vmem %s6, %s250
        %p252 = scmp.lt.s32.totalorder %s21, 1
        %s253 = scalar_select %p252, %s21, 1
        %s254 = smul.addr %s253, 32
        %s255 = smul.addr %s254, 8
        %s256 = scalar_lea.vmem %s0, %s255
        %p257 = scmp.lt.s32.totalorder %s21, 1
        %s258 = scalar_select %p257, %s21, 1
        %s259 = smul.addr %s258, 8
        %s260 = scalar_lea.vmem %s6, %s259
        %v262 = vld [vmem:[%s256] sm:$0xff]
        %v263 = vld [vmem:[%s256 + $0x8] sm:$0xff]
        %v264 = vld [vmem:[%s256 + $0x10] sm:$0xff]
        %v265 = vld [vmem:[%s256 + $0x18] sm:$0xff]
        %v266 = vld [vmem:[%s256 + $0x20] sm:$0xff]
        %v267 = vld [vmem:[%s256 + $0x28] sm:$0xff]
        %v268 = vld [vmem:[%s256 + $0x30] sm:$0xff]
        %v269 = vld [vmem:[%s256 + $0x38] sm:$0xff]
        %v270 = vld [vmem:[%s256 + $0x40] sm:$0xff]
        %v271 = vld [vmem:[%s256 + $0x48] sm:$0xff]
        %v272 = vld [vmem:[%s256 + $0x50] sm:$0xff]
        %v273 = vld [vmem:[%s256 + $0x58] sm:$0xff]
        %v274 = vld [vmem:[%s256 + $0x60] sm:$0xff]
        %v275 = vld [vmem:[%s256 + $0x68] sm:$0xff]
        %v276 = vld [vmem:[%s256 + $0x70] sm:$0xff]
        %v277 = vld [vmem:[%s256 + $0x78] sm:$0xff]
        %v278 = vld [vmem:[%s256 + $0x80] sm:$0xff]
        %v279 = vld [vmem:[%s256 + $0x88] sm:$0xff]
        %v280 = vld [vmem:[%s256 + $0x90] sm:$0xff]
        %v281 = vld [vmem:[%s256 + $0x98] sm:$0xff]
        %v282 = vld [vmem:[%s256 + $0xa0] sm:$0xff]
        %v283 = vld [vmem:[%s256 + $0xa8] sm:$0xff]
        %v284 = vld [vmem:[%s256 + $0xb0] sm:$0xff]
        %v285 = vld [vmem:[%s256 + $0xb8] sm:$0xff]
        %v286 = vld [vmem:[%s256 + $0xc0] sm:$0xff]
        %v287 = vld [vmem:[%s256 + $0xc8] sm:$0xff]
        %v288 = vld [vmem:[%s256 + $0xd0] sm:$0xff]
        %v289 = vld [vmem:[%s256 + $0xd8] sm:$0xff]
        %v290 = vld [vmem:[%s256 + $0xe0] sm:$0xff]
        %v291 = vld [vmem:[%s256 + $0xe8] sm:$0xff]
        %v292 = vld [vmem:[%s256 + $0xf0] sm:$0xff]
        %v293 = vld [vmem:[%s256 + $0xf8] sm:$0xff]
        %v294 = vld [vmem:[%s1] sm:$0xff]
        %v295 = vld [vmem:[%s1 + $0x8] sm:$0xff]
        %v296 = vld [vmem:[%s1 + $0x10] sm:$0xff]
        %v297 = vld [vmem:[%s1 + $0x18] sm:$0xff]
        %v298 = vld [vmem:[%s1 + $0x20] sm:$0xff]
        %v299 = vld [vmem:[%s1 + $0x28] sm:$0xff]
        %v300 = vld [vmem:[%s1 + $0x30] sm:$0xff]
        %v301 = vld [vmem:[%s1 + $0x38] sm:$0xff]
        %v302 = vld [vmem:[%s1 + $0x40] sm:$0xff]
        %v303 = vld [vmem:[%s1 + $0x48] sm:$0xff]
        %v304 = vld [vmem:[%s1 + $0x50] sm:$0xff]
        %v305 = vld [vmem:[%s1 + $0x58] sm:$0xff]
        %v306 = vld [vmem:[%s1 + $0x60] sm:$0xff]
        %v307 = vld [vmem:[%s1 + $0x68] sm:$0xff]
        %v308 = vld [vmem:[%s1 + $0x70] sm:$0xff]
        %v309 = vld [vmem:[%s1 + $0x78] sm:$0xff]
        %v310 = vld [vmem:[%s1 + $0x80] sm:$0xff]
        %v311 = vld [vmem:[%s1 + $0x88] sm:$0xff]
        %v312 = vld [vmem:[%s1 + $0x90] sm:$0xff]
        %v313 = vld [vmem:[%s1 + $0x98] sm:$0xff]
        %v314 = vld [vmem:[%s1 + $0xa0] sm:$0xff]
        %v315 = vld [vmem:[%s1 + $0xa8] sm:$0xff]
        %v316 = vld [vmem:[%s1 + $0xb0] sm:$0xff]
        %v317 = vld [vmem:[%s1 + $0xb8] sm:$0xff]
        %v318 = vld [vmem:[%s1 + $0xc0] sm:$0xff]
        %v319 = vld [vmem:[%s1 + $0xc8] sm:$0xff]
        %v320 = vld [vmem:[%s1 + $0xd0] sm:$0xff]
        %v321 = vld [vmem:[%s1 + $0xd8] sm:$0xff]
        %v322 = vld [vmem:[%s1 + $0xe0] sm:$0xff]
        %v323 = vld [vmem:[%s1 + $0xe8] sm:$0xff]
        %v324 = vld [vmem:[%s1 + $0xf0] sm:$0xff]
        %v325 = vld [vmem:[%s1 + $0xf8] sm:$0xff]
        %v326 = vld [vmem:[%s1 + $0x100] sm:$0xff]
        %v327 = vld [vmem:[%s1 + $0x108] sm:$0xff]
        %v328 = vld [vmem:[%s1 + $0x110] sm:$0xff]
        %v329 = vld [vmem:[%s1 + $0x118] sm:$0xff]
        %v330 = vld [vmem:[%s1 + $0x120] sm:$0xff]
        %v331 = vld [vmem:[%s1 + $0x128] sm:$0xff]
        %v332 = vld [vmem:[%s1 + $0x130] sm:$0xff]
        %v333 = vld [vmem:[%s1 + $0x138] sm:$0xff]
        %v334 = vld [vmem:[%s1 + $0x140] sm:$0xff]
        %v335 = vld [vmem:[%s1 + $0x148] sm:$0xff]
        %v336 = vld [vmem:[%s1 + $0x150] sm:$0xff]
        %v337 = vld [vmem:[%s1 + $0x158] sm:$0xff]
        %v338 = vld [vmem:[%s1 + $0x160] sm:$0xff]
        %v339 = vld [vmem:[%s1 + $0x168] sm:$0xff]
        %v340 = vld [vmem:[%s1 + $0x170] sm:$0xff]
        %v341 = vld [vmem:[%s1 + $0x178] sm:$0xff]
        %v342 = vld [vmem:[%s1 + $0x180] sm:$0xff]
        %v343 = vld [vmem:[%s1 + $0x188] sm:$0xff]
        %v344 = vld [vmem:[%s1 + $0x190] sm:$0xff]
        %v345 = vld [vmem:[%s1 + $0x198] sm:$0xff]
        %v346 = vld [vmem:[%s1 + $0x1a0] sm:$0xff]
        %v347 = vld [vmem:[%s1 + $0x1a8] sm:$0xff]
        %v348 = vld [vmem:[%s1 + $0x1b0] sm:$0xff]
        %v349 = vld [vmem:[%s1 + $0x1b8] sm:$0xff]
        %v350 = vld [vmem:[%s1 + $0x1c0] sm:$0xff]
        %v351 = vld [vmem:[%s1 + $0x1c8] sm:$0xff]
        %v352 = vld [vmem:[%s1 + $0x1d0] sm:$0xff]
        %v353 = vld [vmem:[%s1 + $0x1d8] sm:$0xff]
        %v354 = vld [vmem:[%s1 + $0x1e0] sm:$0xff]
        %v355 = vld [vmem:[%s1 + $0x1e8] sm:$0xff]
        %v356 = vld [vmem:[%s1 + $0x1f0] sm:$0xff]
        %v357 = vld [vmem:[%s1 + $0x1f8] sm:$0xff]
        %v358 = vld [vmem:[%s1 + $0x200] sm:$0xff]
        %v359 = vld [vmem:[%s1 + $0x208] sm:$0xff]
        %v360 = vld [vmem:[%s1 + $0x210] sm:$0xff]
        %v361 = vld [vmem:[%s1 + $0x218] sm:$0xff]
        %v362 = vld [vmem:[%s1 + $0x220] sm:$0xff]
        %v363 = vld [vmem:[%s1 + $0x228] sm:$0xff]
        %v364 = vld [vmem:[%s1 + $0x230] sm:$0xff]
        %v365 = vld [vmem:[%s1 + $0x238] sm:$0xff]
        %v366 = vld [vmem:[%s1 + $0x240] sm:$0xff]
        %v367 = vld [vmem:[%s1 + $0x248] sm:$0xff]
        %v368 = vld [vmem:[%s1 + $0x250] sm:$0xff]
        %v369 = vld [vmem:[%s1 + $0x258] sm:$0xff]
        %v370 = vld [vmem:[%s1 + $0x260] sm:$0xff]
        %v371 = vld [vmem:[%s1 + $0x268] sm:$0xff]
        %v372 = vld [vmem:[%s1 + $0x270] sm:$0xff]
        %v373 = vld [vmem:[%s1 + $0x278] sm:$0xff]
        %v374 = vld [vmem:[%s1 + $0x280] sm:$0xff]
        %v375 = vld [vmem:[%s1 + $0x288] sm:$0xff]
        %v376 = vld [vmem:[%s1 + $0x290] sm:$0xff]
        %v377 = vld [vmem:[%s1 + $0x298] sm:$0xff]
        %v378 = vld [vmem:[%s1 + $0x2a0] sm:$0xff]
        %v379 = vld [vmem:[%s1 + $0x2a8] sm:$0xff]
        %v380 = vld [vmem:[%s1 + $0x2b0] sm:$0xff]
        %v381 = vld [vmem:[%s1 + $0x2b8] sm:$0xff]
        %v382 = vld [vmem:[%s1 + $0x2c0] sm:$0xff]
        %v383 = vld [vmem:[%s1 + $0x2c8] sm:$0xff]
        %v384 = vld [vmem:[%s1 + $0x2d0] sm:$0xff]
        %v385 = vld [vmem:[%s1 + $0x2d8] sm:$0xff]
        %v386 = vld [vmem:[%s1 + $0x2e0] sm:$0xff]
        %v387 = vld [vmem:[%s1 + $0x2e8] sm:$0xff]
        %v388 = vld [vmem:[%s1 + $0x2f0] sm:$0xff]
        %v389 = vld [vmem:[%s1 + $0x2f8] sm:$0xff]
        %v390 = vld [vmem:[%s1 + $0x300] sm:$0xff]
        %v391 = vld [vmem:[%s1 + $0x308] sm:$0xff]
        %v392 = vld [vmem:[%s1 + $0x310] sm:$0xff]
        %v393 = vld [vmem:[%s1 + $0x318] sm:$0xff]
        %v394 = vld [vmem:[%s1 + $0x320] sm:$0xff]
        %v395 = vld [vmem:[%s1 + $0x328] sm:$0xff]
        %v396 = vld [vmem:[%s1 + $0x330] sm:$0xff]
        %v397 = vld [vmem:[%s1 + $0x338] sm:$0xff]
        %v398 = vld [vmem:[%s1 + $0x340] sm:$0xff]
        %v399 = vld [vmem:[%s1 + $0x348] sm:$0xff]
        %v400 = vld [vmem:[%s1 + $0x350] sm:$0xff]
        %v401 = vld [vmem:[%s1 + $0x358] sm:$0xff]
        %v402 = vld [vmem:[%s1 + $0x360] sm:$0xff]
        %v403 = vld [vmem:[%s1 + $0x368] sm:$0xff]
        %v404 = vld [vmem:[%s1 + $0x370] sm:$0xff]
        %v405 = vld [vmem:[%s1 + $0x378] sm:$0xff]
        %v406 = vld [vmem:[%s1 + $0x380] sm:$0xff]
        %v407 = vld [vmem:[%s1 + $0x388] sm:$0xff]
        %v408 = vld [vmem:[%s1 + $0x390] sm:$0xff]
        %v409 = vld [vmem:[%s1 + $0x398] sm:$0xff]
        %v410 = vld [vmem:[%s1 + $0x3a0] sm:$0xff]
        %v411 = vld [vmem:[%s1 + $0x3a8] sm:$0xff]
        %v412 = vld [vmem:[%s1 + $0x3b0] sm:$0xff]
        %v413 = vld [vmem:[%s1 + $0x3b8] sm:$0xff]
        %v414 = vld [vmem:[%s1 + $0x3c0] sm:$0xff]
        %v415 = vld [vmem:[%s1 + $0x3c8] sm:$0xff]
        %v416 = vld [vmem:[%s1 + $0x3d0] sm:$0xff]
        %v417 = vld [vmem:[%s1 + $0x3d8] sm:$0xff]
        %v418 = vld [vmem:[%s1 + $0x3e0] sm:$0xff]
        %v419 = vld [vmem:[%s1 + $0x3e8] sm:$0xff]
        %v420 = vld [vmem:[%s1 + $0x3f0] sm:$0xff]
        %v421 = vld [vmem:[%s1 + $0x3f8] sm:$0xff]
        %v422 = vld [vmem:[%s1 + $0x400] sm:$0xff]
        %v423 = vld [vmem:[%s1 + $0x408] sm:$0xff]
        %v424 = vld [vmem:[%s1 + $0x410] sm:$0xff]
        %v425 = vld [vmem:[%s1 + $0x418] sm:$0xff]
        %v426 = vld [vmem:[%s1 + $0x420] sm:$0xff]
        %v427 = vld [vmem:[%s1 + $0x428] sm:$0xff]
        %v428 = vld [vmem:[%s1 + $0x430] sm:$0xff]
        %v429 = vld [vmem:[%s1 + $0x438] sm:$0xff]
        %v430 = vld [vmem:[%s1 + $0x440] sm:$0xff]
        %v431 = vld [vmem:[%s1 + $0x448] sm:$0xff]
        %v432 = vld [vmem:[%s1 + $0x450] sm:$0xff]
        %v433 = vld [vmem:[%s1 + $0x458] sm:$0xff]
        %v434 = vld [vmem:[%s1 + $0x460] sm:$0xff]
        %v435 = vld [vmem:[%s1 + $0x468] sm:$0xff]
        %v436 = vld [vmem:[%s1 + $0x470] sm:$0xff]
        %v437 = vld [vmem:[%s1 + $0x478] sm:$0xff]
        %v438 = vld [vmem:[%s1 + $0x480] sm:$0xff]
        %v439 = vld [vmem:[%s1 + $0x488] sm:$0xff]
        %v440 = vld [vmem:[%s1 + $0x490] sm:$0xff]
        %v441 = vld [vmem:[%s1 + $0x498] sm:$0xff]
        %v442 = vld [vmem:[%s1 + $0x4a0] sm:$0xff]
        %v443 = vld [vmem:[%s1 + $0x4a8] sm:$0xff]
        %v444 = vld [vmem:[%s1 + $0x4b0] sm:$0xff]
        %v445 = vld [vmem:[%s1 + $0x4b8] sm:$0xff]
        %v446 = vld [vmem:[%s1 + $0x4c0] sm:$0xff]
        %v447 = vld [vmem:[%s1 + $0x4c8] sm:$0xff]
        %v448 = vld [vmem:[%s1 + $0x4d0] sm:$0xff]
        %v449 = vld [vmem:[%s1 + $0x4d8] sm:$0xff]
        %v450 = vld [vmem:[%s1 + $0x4e0] sm:$0xff]
        %v451 = vld [vmem:[%s1 + $0x4e8] sm:$0xff]
        %v452 = vld [vmem:[%s1 + $0x4f0] sm:$0xff]
        %v453 = vld [vmem:[%s1 + $0x4f8] sm:$0xff]
        %v454 = vld [vmem:[%s1 + $0x500] sm:$0xff]
        %v455 = vld [vmem:[%s1 + $0x508] sm:$0xff]
        %v456 = vld [vmem:[%s1 + $0x510] sm:$0xff]
        %v457 = vld [vmem:[%s1 + $0x518] sm:$0xff]
        %v458 = vld [vmem:[%s1 + $0x520] sm:$0xff]
        %v459 = vld [vmem:[%s1 + $0x528] sm:$0xff]
        %v460 = vld [vmem:[%s1 + $0x530] sm:$0xff]
        %v461 = vld [vmem:[%s1 + $0x538] sm:$0xff]
        %v462 = vld [vmem:[%s1 + $0x540] sm:$0xff]
        %v463 = vld [vmem:[%s1 + $0x548] sm:$0xff]
        %v464 = vld [vmem:[%s1 + $0x550] sm:$0xff]
        %v465 = vld [vmem:[%s1 + $0x558] sm:$0xff]
        %v466 = vld [vmem:[%s1 + $0x560] sm:$0xff]
        %v467 = vld [vmem:[%s1 + $0x568] sm:$0xff]
        %v468 = vld [vmem:[%s1 + $0x570] sm:$0xff]
        %v469 = vld [vmem:[%s1 + $0x578] sm:$0xff]
        %v470 = vld [vmem:[%s1 + $0x580] sm:$0xff]
        %v471 = vld [vmem:[%s1 + $0x588] sm:$0xff]
        %v472 = vld [vmem:[%s1 + $0x590] sm:$0xff]
        %v473 = vld [vmem:[%s1 + $0x598] sm:$0xff]
        %v474 = vld [vmem:[%s1 + $0x5a0] sm:$0xff]
        %v475 = vld [vmem:[%s1 + $0x5a8] sm:$0xff]
        %v476 = vld [vmem:[%s1 + $0x5b0] sm:$0xff]
        %v477 = vld [vmem:[%s1 + $0x5b8] sm:$0xff]
        %v478 = vld [vmem:[%s1 + $0x5c0] sm:$0xff]
        %v479 = vld [vmem:[%s1 + $0x5c8] sm:$0xff]
        %v480 = vld [vmem:[%s1 + $0x5d0] sm:$0xff]
        %v481 = vld [vmem:[%s1 + $0x5d8] sm:$0xff]
        %v482 = vld [vmem:[%s1 + $0x5e0] sm:$0xff]
        %v483 = vld [vmem:[%s1 + $0x5e8] sm:$0xff]
        %v484 = vld [vmem:[%s1 + $0x5f0] sm:$0xff]
        %v485 = vld [vmem:[%s1 + $0x5f8] sm:$0xff]
        %v486 = vld [vmem:[%s1 + $0x600] sm:$0xff]
        %v487 = vld [vmem:[%s1 + $0x608] sm:$0xff]
        %v488 = vld [vmem:[%s1 + $0x610] sm:$0xff]
        %v489 = vld [vmem:[%s1 + $0x618] sm:$0xff]
        %v490 = vld [vmem:[%s1 + $0x620] sm:$0xff]
        %v491 = vld [vmem:[%s1 + $0x628] sm:$0xff]
        %v492 = vld [vmem:[%s1 + $0x630] sm:$0xff]
        %v493 = vld [vmem:[%s1 + $0x638] sm:$0xff]
        %v494 = vld [vmem:[%s1 + $0x640] sm:$0xff]
        %v495 = vld [vmem:[%s1 + $0x648] sm:$0xff]
        %v496 = vld [vmem:[%s1 + $0x650] sm:$0xff]
        %v497 = vld [vmem:[%s1 + $0x658] sm:$0xff]
        %v498 = vld [vmem:[%s1 + $0x660] sm:$0xff]
        %v499 = vld [vmem:[%s1 + $0x668] sm:$0xff]
        %v500 = vld [vmem:[%s1 + $0x670] sm:$0xff]
        %v501 = vld [vmem:[%s1 + $0x678] sm:$0xff]
        %v502 = vld [vmem:[%s1 + $0x680] sm:$0xff]
        %v503 = vld [vmem:[%s1 + $0x688] sm:$0xff]
        %v504 = vld [vmem:[%s1 + $0x690] sm:$0xff]
        %v505 = vld [vmem:[%s1 + $0x698] sm:$0xff]
        %v506 = vld [vmem:[%s1 + $0x6a0] sm:$0xff]
        %v507 = vld [vmem:[%s1 + $0x6a8] sm:$0xff]
        %v508 = vld [vmem:[%s1 + $0x6b0] sm:$0xff]
        %v509 = vld [vmem:[%s1 + $0x6b8] sm:$0xff]
        %v510 = vld [vmem:[%s1 + $0x6c0] sm:$0xff]
        %v511 = vld [vmem:[%s1 + $0x6c8] sm:$0xff]
        %v512 = vld [vmem:[%s1 + $0x6d0] sm:$0xff]
        %v513 = vld [vmem:[%s1 + $0x6d8] sm:$0xff]
        %v514 = vld [vmem:[%s1 + $0x6e0] sm:$0xff]
        %v515 = vld [vmem:[%s1 + $0x6e8] sm:$0xff]
        %v516 = vld [vmem:[%s1 + $0x6f0] sm:$0xff]
        %v517 = vld [vmem:[%s1 + $0x6f8] sm:$0xff]
        %v518 = vld [vmem:[%s1 + $0x700] sm:$0xff]
        %v519 = vld [vmem:[%s1 + $0x708] sm:$0xff]
        %v520 = vld [vmem:[%s1 + $0x710] sm:$0xff]
        %v521 = vld [vmem:[%s1 + $0x718] sm:$0xff]
        %v522 = vld [vmem:[%s1 + $0x720] sm:$0xff]
        %v523 = vld [vmem:[%s1 + $0x728] sm:$0xff]
        %v524 = vld [vmem:[%s1 + $0x730] sm:$0xff]
        %v525 = vld [vmem:[%s1 + $0x738] sm:$0xff]
        %v526 = vld [vmem:[%s1 + $0x740] sm:$0xff]
        %v527 = vld [vmem:[%s1 + $0x748] sm:$0xff]
        %v528 = vld [vmem:[%s1 + $0x750] sm:$0xff]
        %v529 = vld [vmem:[%s1 + $0x758] sm:$0xff]
        %v530 = vld [vmem:[%s1 + $0x760] sm:$0xff]
        %v531 = vld [vmem:[%s1 + $0x768] sm:$0xff]
        %v532 = vld [vmem:[%s1 + $0x770] sm:$0xff]
        %v533 = vld [vmem:[%s1 + $0x778] sm:$0xff]
        %v534 = vld [vmem:[%s1 + $0x780] sm:$0xff]
        %v535 = vld [vmem:[%s1 + $0x788] sm:$0xff]
        %v536 = vld [vmem:[%s1 + $0x790] sm:$0xff]
        %v537 = vld [vmem:[%s1 + $0x798] sm:$0xff]
        %v538 = vld [vmem:[%s1 + $0x7a0] sm:$0xff]
        %v539 = vld [vmem:[%s1 + $0x7a8] sm:$0xff]
        %v540 = vld [vmem:[%s1 + $0x7b0] sm:$0xff]
        %v541 = vld [vmem:[%s1 + $0x7b8] sm:$0xff]
        %v542 = vld [vmem:[%s1 + $0x7c0] sm:$0xff]
        %v543 = vld [vmem:[%s1 + $0x7c8] sm:$0xff]
        %v544 = vld [vmem:[%s1 + $0x7d0] sm:$0xff]
        %v545 = vld [vmem:[%s1 + $0x7d8] sm:$0xff]
        %v546 = vld [vmem:[%s1 + $0x7e0] sm:$0xff]
        %v547 = vld [vmem:[%s1 + $0x7e8] sm:$0xff]
        %v548 = vld [vmem:[%s1 + $0x7f0] sm:$0xff]
        %v549 = vld [vmem:[%s1 + $0x7f8] sm:$0xff]
        %v550 = vld [vmem:[%s2] sm:$0xf]
        %v552 = vperm.slane %v550, 0
        %v553 = vperm.slane %v550, 1
        %v554 = vperm.slane %v550, 2
        %v555 = vperm.slane %v550, 3
        %560 = vmatpush.msra.mxu0 %v354
        %561 = vmatpush.msra.mxu0 %v350
        %562 = vmatpush.msra.mxu0 %v346
        %563 = vmatpush.msra.mxu0 %v342
        %564 = vmatpush.msra.mxu0 %v338
        %565 = vmatpush.msra.mxu0 %v334
        %566 = vmatpush.msra.mxu0 %v330
        %567 = vmatpush.msra.mxu0 %v326
        %568 = vmatpush.msra.mxu0 %v322
        %569 = vmatpush.msra.mxu0 %v318
        %570 = vmatpush.msra.mxu0 %v314
        %571 = vmatpush.msra.mxu0 %v310
        %572 = vmatpush.msra.mxu0 %v306
        %573 = vmatpush.msra.mxu0 %v302
        %574 = vmatpush.msra.mxu0 %v298
        %575 = vmatpush.msra.mxu0 %v294
        %576 = vmatmul.f32.gmra.mxu0 %v262
        %v577 = vpop.f32.mrf.mxu0
        %v578 = vadd.f32 %v552, %v577
        %579 = vmatmul.f32.gmra.mxu0 %v266
        %v580 = vpop.f32.mrf.mxu0
        %v581 = vadd.f32 %v552, %v580
        %582 = vmatmul.f32.gmra.mxu0 %v270
        %v583 = vpop.f32.mrf.mxu0
        %v584 = vadd.f32 %v552, %v583
        %585 = vmatmul.f32.gmra.mxu0 %v274
        %v586 = vpop.f32.mrf.mxu0
        %v587 = vadd.f32 %v552, %v586
        %588 = vmatmul.f32.gmra.mxu0 %v278
        %v589 = vpop.f32.mrf.mxu0
        %v590 = vadd.f32 %v552, %v589
        %591 = vmatmul.f32.gmra.mxu0 %v282
        %v592 = vpop.f32.mrf.mxu0
        %v593 = vadd.f32 %v552, %v592
        %594 = vmatmul.f32.gmra.mxu0 %v286
        %v595 = vpop.f32.mrf.mxu0
        %v596 = vadd.f32 %v552, %v595
        %597 = vmatmul.f32.gmra.mxu0 %v290
        %v598 = vpop.f32.mrf.mxu0
        %v599 = vadd.f32 %v552, %v598
        %600 = vdwg.mxu0
        %601 = vmatpush.msra.mxu0 %v418
        %602 = vmatpush.msra.mxu0 %v414
        %603 = vmatpush.msra.mxu0 %v410
        %604 = vmatpush.msra.mxu0 %v406
        %605 = vmatpush.msra.mxu0 %v402
        %606 = vmatpush.msra.mxu0 %v398
        %607 = vmatpush.msra.mxu0 %v394
        %608 = vmatpush.msra.mxu0 %v390
        %609 = vmatpush.msra.mxu0 %v386
        %610 = vmatpush.msra.mxu0 %v382
        %611 = vmatpush.msra.mxu0 %v378
        %612 = vmatpush.msra.mxu0 %v374
        %613 = vmatpush.msra.mxu0 %v370
        %614 = vmatpush.msra.mxu0 %v366
        %615 = vmatpush.msra.mxu0 %v362
        %616 = vmatpush.msra.mxu0 %v358
        %617 = vmatmul.f32.gmra.mxu0 %v263
        %v618 = vpop.f32.mrf.mxu0
        %v619 = vadd.f32 %v578, %v618
        %620 = vmatmul.f32.gmra.mxu0 %v267
        %v621 = vpop.f32.mrf.mxu0
        %v622 = vadd.f32 %v581, %v621
        %623 = vmatmul.f32.gmra.mxu0 %v271
        %v624 = vpop.f32.mrf.mxu0
        %v625 = vadd.f32 %v584, %v624
        %626 = vmatmul.f32.gmra.mxu0 %v275
        %v627 = vpop.f32.mrf.mxu0
        %v628 = vadd.f32 %v587, %v627
        %629 = vmatmul.f32.gmra.mxu0 %v279
        %v630 = vpop.f32.mrf.mxu0
        %v631 = vadd.f32 %v590, %v630
        %632 = vmatmul.f32.gmra.mxu0 %v283
        %v633 = vpop.f32.mrf.mxu0
        %v634 = vadd.f32 %v593, %v633
        %635 = vmatmul.f32.gmra.mxu0 %v287
        %v636 = vpop.f32.mrf.mxu0
        %v637 = vadd.f32 %v596, %v636
        %638 = vmatmul.f32.gmra.mxu0 %v291
        %v639 = vpop.f32.mrf.mxu0
        %v640 = vadd.f32 %v599, %v639
        %641 = vdwg.mxu0
        %642 = vmatpush.msra.mxu0 %v482
        %643 = vmatpush.msra.mxu0 %v478
        %644 = vmatpush.msra.mxu0 %v474
        %645 = vmatpush.msra.mxu0 %v470
        %646 = vmatpush.msra.mxu0 %v466
        %647 = vmatpush.msra.mxu0 %v462
        %648 = vmatpush.msra.mxu0 %v458
        %649 = vmatpush.msra.mxu0 %v454
        %650 = vmatpush.msra.mxu0 %v450
        %651 = vmatpush.msra.mxu0 %v446
        %652 = vmatpush.msra.mxu0 %v442
        %653 = vmatpush.msra.mxu0 %v438
        %654 = vmatpush.msra.mxu0 %v434
        %655 = vmatpush.msra.mxu0 %v430
        %656 = vmatpush.msra.mxu0 %v426
        %657 = vmatpush.msra.mxu0 %v422
        %658 = vmatmul.f32.gmra.mxu0 %v264
        %v659 = vpop.f32.mrf.mxu0
        %v660 = vadd.f32 %v619, %v659
        %661 = vmatmul.f32.gmra.mxu0 %v268
        %v662 = vpop.f32.mrf.mxu0
        %v663 = vadd.f32 %v622, %v662
        %664 = vmatmul.f32.gmra.mxu0 %v272
        %v665 = vpop.f32.mrf.mxu0
        %v666 = vadd.f32 %v625, %v665
        %667 = vmatmul.f32.gmra.mxu0 %v276
        %v668 = vpop.f32.mrf.mxu0
        %v669 = vadd.f32 %v628, %v668
        %670 = vmatmul.f32.gmra.mxu0 %v280
        %v671 = vpop.f32.mrf.mxu0
        %v672 = vadd.f32 %v631, %v671
        %673 = vmatmul.f32.gmra.mxu0 %v284
        %v674 = vpop.f32.mrf.mxu0
        %v675 = vadd.f32 %v634, %v674
        %676 = vmatmul.f32.gmra.mxu0 %v288
        %v677 = vpop.f32.mrf.mxu0
        %v678 = vadd.f32 %v637, %v677
        %679 = vmatmul.f32.gmra.mxu0 %v292
        %v680 = vpop.f32.mrf.mxu0
        %v681 = vadd.f32 %v640, %v680
        %682 = vdwg.mxu0
        %683 = vmatpush.msra.mxu0 %v546
        %684 = vmatpush.msra.mxu0 %v542
        %685 = vmatpush.msra.mxu0 %v538
        %686 = vmatpush.msra.mxu0 %v534
        %687 = vmatpush.msra.mxu0 %v530
        %688 = vmatpush.msra.mxu0 %v526
        %689 = vmatpush.msra.mxu0 %v522
        %690 = vmatpush.msra.mxu0 %v518
        %691 = vmatpush.msra.mxu0 %v514
        %692 = vmatpush.msra.mxu0 %v510
        %693 = vmatpush.msra.mxu0 %v506
        %694 = vmatpush.msra.mxu0 %v502
        %695 = vmatpush.msra.mxu0 %v498
        %696 = vmatpush.msra.mxu0 %v494
        %697 = vmatpush.msra.mxu0 %v490
        %698 = vmatpush.msra.mxu0 %v486
        %699 = vmatmul.f32.gmra.mxu0 %v265
        %v700 = vpop.f32.mrf.mxu0
        %v701 = vadd.f32 %v660, %v700
        %702 = vmatmul.f32.gmra.mxu0 %v269
        %v703 = vpop.f32.mrf.mxu0
        %v704 = vadd.f32 %v663, %v703
        %705 = vmatmul.f32.gmra.mxu0 %v273
        %v706 = vpop.f32.mrf.mxu0
        %v707 = vadd.f32 %v666, %v706
        %708 = vmatmul.f32.gmra.mxu0 %v277
        %v709 = vpop.f32.mrf.mxu0
        %v710 = vadd.f32 %v669, %v709
        %711 = vmatmul.f32.gmra.mxu0 %v281
        %v712 = vpop.f32.mrf.mxu0
        %v713 = vadd.f32 %v672, %v712
        %714 = vmatmul.f32.gmra.mxu0 %v285
        %v715 = vpop.f32.mrf.mxu0
        %v716 = vadd.f32 %v675, %v715
        %717 = vmatmul.f32.gmra.mxu0 %v289
        %v718 = vpop.f32.mrf.mxu0
        %v719 = vadd.f32 %v678, %v718
        %720 = vmatmul.f32.gmra.mxu0 %v293
        %v721 = vpop.f32.mrf.mxu0
        %v722 = vadd.f32 %v681, %v721
        %723 = vdwg.mxu0
        %724 = vmatpush.msra.mxu0 %v355
        %725 = vmatpush.msra.mxu0 %v351
        %726 = vmatpush.msra.mxu0 %v347
        %727 = vmatpush.msra.mxu0 %v343
        %728 = vmatpush.msra.mxu0 %v339
        %729 = vmatpush.msra.mxu0 %v335
        %730 = vmatpush.msra.mxu0 %v331
        %731 = vmatpush.msra.mxu0 %v327
        %732 = vmatpush.msra.mxu0 %v323
        %733 = vmatpush.msra.mxu0 %v319
        %734 = vmatpush.msra.mxu0 %v315
        %735 = vmatpush.msra.mxu0 %v311
        %736 = vmatpush.msra.mxu0 %v307
        %737 = vmatpush.msra.mxu0 %v303
        %738 = vmatpush.msra.mxu0 %v299
        %739 = vmatpush.msra.mxu0 %v295
        %740 = vmatmul.f32.gmra.mxu0 %v262
        %v741 = vpop.f32.mrf.mxu0
        %v742 = vadd.f32 %v553, %v741
        %743 = vmatmul.f32.gmra.mxu0 %v266
        %v744 = vpop.f32.mrf.mxu0
        %v745 = vadd.f32 %v553, %v744
        %746 = vmatmul.f32.gmra.mxu0 %v270
        %v747 = vpop.f32.mrf.mxu0
        %v748 = vadd.f32 %v553, %v747
        %749 = vmatmul.f32.gmra.mxu0 %v274
        %v750 = vpop.f32.mrf.mxu0
        %v751 = vadd.f32 %v553, %v750
        %752 = vmatmul.f32.gmra.mxu0 %v278
        %v753 = vpop.f32.mrf.mxu0
        %v754 = vadd.f32 %v553, %v753
        %755 = vmatmul.f32.gmra.mxu0 %v282
        %v756 = vpop.f32.mrf.mxu0
        %v757 = vadd.f32 %v553, %v756
        %758 = vmatmul.f32.gmra.mxu0 %v286
        %v759 = vpop.f32.mrf.mxu0
        %v760 = vadd.f32 %v553, %v759
        %761 = vmatmul.f32.gmra.mxu0 %v290
        %v762 = vpop.f32.mrf.mxu0
        %v763 = vadd.f32 %v553, %v762
        %764 = vdwg.mxu0
        %765 = vmatpush.msra.mxu0 %v419
        %766 = vmatpush.msra.mxu0 %v415
        %767 = vmatpush.msra.mxu0 %v411
        %768 = vmatpush.msra.mxu0 %v407
        %769 = vmatpush.msra.mxu0 %v403
        %770 = vmatpush.msra.mxu0 %v399
        %771 = vmatpush.msra.mxu0 %v395
        %772 = vmatpush.msra.mxu0 %v391
        %773 = vmatpush.msra.mxu0 %v387
        %774 = vmatpush.msra.mxu0 %v383
        %775 = vmatpush.msra.mxu0 %v379
        %776 = vmatpush.msra.mxu0 %v375
        %777 = vmatpush.msra.mxu0 %v371
        %778 = vmatpush.msra.mxu0 %v367
        %779 = vmatpush.msra.mxu0 %v363
        %780 = vmatpush.msra.mxu0 %v359
        %781 = vmatmul.f32.gmra.mxu0 %v263
        %v782 = vpop.f32.mrf.mxu0
        %v783 = vadd.f32 %v742, %v782
        %784 = vmatmul.f32.gmra.mxu0 %v267
        %v785 = vpop.f32.mrf.mxu0
        %v786 = vadd.f32 %v745, %v785
        %787 = vmatmul.f32.gmra.mxu0 %v271
        %v788 = vpop.f32.mrf.mxu0
        %v789 = vadd.f32 %v748, %v788
        %790 = vmatmul.f32.gmra.mxu0 %v275
        %v791 = vpop.f32.mrf.mxu0
        %v792 = vadd.f32 %v751, %v791
        %793 = vmatmul.f32.gmra.mxu0 %v279
        %v794 = vpop.f32.mrf.mxu0
        %v795 = vadd.f32 %v754, %v794
        %796 = vmatmul.f32.gmra.mxu0 %v283
        %v797 = vpop.f32.mrf.mxu0
        %v798 = vadd.f32 %v757, %v797
        %799 = vmatmul.f32.gmra.mxu0 %v287
        %v800 = vpop.f32.mrf.mxu0
        %v801 = vadd.f32 %v760, %v800
        %802 = vmatmul.f32.gmra.mxu0 %v291
        %v803 = vpop.f32.mrf.mxu0
        %v804 = vadd.f32 %v763, %v803
        %805 = vdwg.mxu0
        %806 = vmatpush.msra.mxu0 %v483
        %807 = vmatpush.msra.mxu0 %v479
        %808 = vmatpush.msra.mxu0 %v475
        %809 = vmatpush.msra.mxu0 %v471
        %810 = vmatpush.msra.mxu0 %v467
        %811 = vmatpush.msra.mxu0 %v463
        %812 = vmatpush.msra.mxu0 %v459
        %813 = vmatpush.msra.mxu0 %v455
        %814 = vmatpush.msra.mxu0 %v451
        %815 = vmatpush.msra.mxu0 %v447
        %816 = vmatpush.msra.mxu0 %v443
        %817 = vmatpush.msra.mxu0 %v439
        %818 = vmatpush.msra.mxu0 %v435
        %819 = vmatpush.msra.mxu0 %v431
        %820 = vmatpush.msra.mxu0 %v427
        %821 = vmatpush.msra.mxu0 %v423
        %822 = vmatmul.f32.gmra.mxu0 %v264
        %v823 = vpop.f32.mrf.mxu0
        %v824 = vadd.f32 %v783, %v823
        %825 = vmatmul.f32.gmra.mxu0 %v268
        %v826 = vpop.f32.mrf.mxu0
        %v827 = vadd.f32 %v786, %v826
        %828 = vmatmul.f32.gmra.mxu0 %v272
        %v829 = vpop.f32.mrf.mxu0
        %v830 = vadd.f32 %v789, %v829
        %831 = vmatmul.f32.gmra.mxu0 %v276
        %v832 = vpop.f32.mrf.mxu0
        %v833 = vadd.f32 %v792, %v832
        %834 = vmatmul.f32.gmra.mxu0 %v280
        %v835 = vpop.f32.mrf.mxu0
        %v836 = vadd.f32 %v795, %v835
        %837 = vmatmul.f32.gmra.mxu0 %v284
        %v838 = vpop.f32.mrf.mxu0
        %v839 = vadd.f32 %v798, %v838
        %840 = vmatmul.f32.gmra.mxu0 %v288
        %v841 = vpop.f32.mrf.mxu0
        %v842 = vadd.f32 %v801, %v841
        %843 = vmatmul.f32.gmra.mxu0 %v292
        %v844 = vpop.f32.mrf.mxu0
        %v845 = vadd.f32 %v804, %v844
        %846 = vdwg.mxu0
        %847 = vmatpush.msra.mxu0 %v547
        %848 = vmatpush.msra.mxu0 %v543
        %849 = vmatpush.msra.mxu0 %v539
        %850 = vmatpush.msra.mxu0 %v535
        %851 = vmatpush.msra.mxu0 %v531
        %852 = vmatpush.msra.mxu0 %v527
        %853 = vmatpush.msra.mxu0 %v523
        %854 = vmatpush.msra.mxu0 %v519
        %855 = vmatpush.msra.mxu0 %v515
        %856 = vmatpush.msra.mxu0 %v511
        %857 = vmatpush.msra.mxu0 %v507
        %858 = vmatpush.msra.mxu0 %v503
        %859 = vmatpush.msra.mxu0 %v499
        %860 = vmatpush.msra.mxu0 %v495
        %861 = vmatpush.msra.mxu0 %v491
        %862 = vmatpush.msra.mxu0 %v487
        %863 = vmatmul.f32.gmra.mxu0 %v265
        %v864 = vpop.f32.mrf.mxu0
        %v865 = vadd.f32 %v824, %v864
        %866 = vmatmul.f32.gmra.mxu0 %v269
        %v867 = vpop.f32.mrf.mxu0
        %v868 = vadd.f32 %v827, %v867
        %869 = vmatmul.f32.gmra.mxu0 %v273
        %v870 = vpop.f32.mrf.mxu0
        %v871 = vadd.f32 %v830, %v870
        %872 = vmatmul.f32.gmra.mxu0 %v277
        %v873 = vpop.f32.mrf.mxu0
        %v874 = vadd.f32 %v833, %v873
        %875 = vmatmul.f32.gmra.mxu0 %v281
        %v876 = vpop.f32.mrf.mxu0
        %v877 = vadd.f32 %v836, %v876
        %878 = vmatmul.f32.gmra.mxu0 %v285
        %v879 = vpop.f32.mrf.mxu0
        %v880 = vadd.f32 %v839, %v879
        %881 = vmatmul.f32.gmra.mxu0 %v289
        %v882 = vpop.f32.mrf.mxu0
        %v883 = vadd.f32 %v842, %v882
        %884 = vmatmul.f32.gmra.mxu0 %v293
        %v885 = vpop.f32.mrf.mxu0
        %v886 = vadd.f32 %v845, %v885
        %887 = vdwg.mxu0
        %888 = vmatpush.msra.mxu0 %v356
        %889 = vmatpush.msra.mxu0 %v352
        %890 = vmatpush.msra.mxu0 %v348
        %891 = vmatpush.msra.mxu0 %v344
        %892 = vmatpush.msra.mxu0 %v340
        %893 = vmatpush.msra.mxu0 %v336
        %894 = vmatpush.msra.mxu0 %v332
        %895 = vmatpush.msra.mxu0 %v328
        %896 = vmatpush.msra.mxu0 %v324
        %897 = vmatpush.msra.mxu0 %v320
        %898 = vmatpush.msra.mxu0 %v316
        %899 = vmatpush.msra.mxu0 %v312
        %900 = vmatpush.msra.mxu0 %v308
        %901 = vmatpush.msra.mxu0 %v304
        %902 = vmatpush.msra.mxu0 %v300
        %903 = vmatpush.msra.mxu0 %v296
        %904 = vmatmul.f32.gmra.mxu0 %v262
        %v905 = vpop.f32.mrf.mxu0
        %v906 = vadd.f32 %v554, %v905
        %907 = vmatmul.f32.gmra.mxu0 %v266
        %v908 = vpop.f32.mrf.mxu0
        %v909 = vadd.f32 %v554, %v908
        %910 = vmatmul.f32.gmra.mxu0 %v270
        %v911 = vpop.f32.mrf.mxu0
        %v912 = vadd.f32 %v554, %v911
        %913 = vmatmul.f32.gmra.mxu0 %v274
        %v914 = vpop.f32.mrf.mxu0
        %v915 = vadd.f32 %v554, %v914
        %916 = vmatmul.f32.gmra.mxu0 %v278
        %v917 = vpop.f32.mrf.mxu0
        %v918 = vadd.f32 %v554, %v917
        %919 = vmatmul.f32.gmra.mxu0 %v282
        %v920 = vpop.f32.mrf.mxu0
        %v921 = vadd.f32 %v554, %v920
        %922 = vmatmul.f32.gmra.mxu0 %v286
        %v923 = vpop.f32.mrf.mxu0
        %v924 = vadd.f32 %v554, %v923
        %925 = vmatmul.f32.gmra.mxu0 %v290
        %v926 = vpop.f32.mrf.mxu0
        %v927 = vadd.f32 %v554, %v926
        %928 = vdwg.mxu0
        %929 = vmatpush.msra.mxu0 %v420
        %930 = vmatpush.msra.mxu0 %v416
        %931 = vmatpush.msra.mxu0 %v412
        %932 = vmatpush.msra.mxu0 %v408
        %933 = vmatpush.msra.mxu0 %v404
        %934 = vmatpush.msra.mxu0 %v400
        %935 = vmatpush.msra.mxu0 %v396
        %936 = vmatpush.msra.mxu0 %v392
        %937 = vmatpush.msra.mxu0 %v388
        %938 = vmatpush.msra.mxu0 %v384
        %939 = vmatpush.msra.mxu0 %v380
        %940 = vmatpush.msra.mxu0 %v376
        %941 = vmatpush.msra.mxu0 %v372
        %942 = vmatpush.msra.mxu0 %v368
        %943 = vmatpush.msra.mxu0 %v364
        %944 = vmatpush.msra.mxu0 %v360
        %945 = vmatmul.f32.gmra.mxu0 %v263
        %v946 = vpop.f32.mrf.mxu0
        %v947 = vadd.f32 %v906, %v946
        %948 = vmatmul.f32.gmra.mxu0 %v267
        %v949 = vpop.f32.mrf.mxu0
        %v950 = vadd.f32 %v909, %v949
        %951 = vmatmul.f32.gmra.mxu0 %v271
        %v952 = vpop.f32.mrf.mxu0
        %v953 = vadd.f32 %v912, %v952
        %954 = vmatmul.f32.gmra.mxu0 %v275
        %v955 = vpop.f32.mrf.mxu0
        %v956 = vadd.f32 %v915, %v955
        %957 = vmatmul.f32.gmra.mxu0 %v279
        %v958 = vpop.f32.mrf.mxu0
        %v959 = vadd.f32 %v918, %v958
        %960 = vmatmul.f32.gmra.mxu0 %v283
        %v961 = vpop.f32.mrf.mxu0
        %v962 = vadd.f32 %v921, %v961
        %963 = vmatmul.f32.gmra.mxu0 %v287
        %v964 = vpop.f32.mrf.mxu0
        %v965 = vadd.f32 %v924, %v964
        %966 = vmatmul.f32.gmra.mxu0 %v291
        %v967 = vpop.f32.mrf.mxu0
        %v968 = vadd.f32 %v927, %v967
        %969 = vdwg.mxu0
        %970 = vmatpush.msra.mxu0 %v484
        %971 = vmatpush.msra.mxu0 %v480
        %972 = vmatpush.msra.mxu0 %v476
        %973 = vmatpush.msra.mxu0 %v472
        %974 = vmatpush.msra.mxu0 %v468
        %975 = vmatpush.msra.mxu0 %v464
        %976 = vmatpush.msra.mxu0 %v460
        %977 = vmatpush.msra.mxu0 %v456
        %978 = vmatpush.msra.mxu0 %v452
        %979 = vmatpush.msra.mxu0 %v448
        %980 = vmatpush.msra.mxu0 %v444
        %981 = vmatpush.msra.mxu0 %v440
        %982 = vmatpush.msra.mxu0 %v436
        %983 = vmatpush.msra.mxu0 %v432
        %984 = vmatpush.msra.mxu0 %v428
        %985 = vmatpush.msra.mxu0 %v424
        %986 = vmatmul.f32.gmra.mxu0 %v264
        %v987 = vpop.f32.mrf.mxu0
        %v988 = vadd.f32 %v947, %v987
        %989 = vmatmul.f32.gmra.mxu0 %v268
        %v990 = vpop.f32.mrf.mxu0
        %v991 = vadd.f32 %v950, %v990
        %992 = vmatmul.f32.gmra.mxu0 %v272
        %v993 = vpop.f32.mrf.mxu0
        %v994 = vadd.f32 %v953, %v993
        %995 = vmatmul.f32.gmra.mxu0 %v276
        %v996 = vpop.f32.mrf.mxu0
        %v997 = vadd.f32 %v956, %v996
        %998 = vmatmul.f32.gmra.mxu0 %v280
        %v999 = vpop.f32.mrf.mxu0
        %v1000 = vadd.f32 %v959, %v999
        %1001 = vmatmul.f32.gmra.mxu0 %v284
        %v1002 = vpop.f32.mrf.mxu0
        %v1003 = vadd.f32 %v962, %v1002
        %1004 = vmatmul.f32.gmra.mxu0 %v288
        %v1005 = vpop.f32.mrf.mxu0
        %v1006 = vadd.f32 %v965, %v1005
        %1007 = vmatmul.f32.gmra.mxu0 %v292
        %v1008 = vpop.f32.mrf.mxu0
        %v1009 = vadd.f32 %v968, %v1008
        %1010 = vdwg.mxu0
        %1011 = vmatpush.msra.mxu0 %v548
        %1012 = vmatpush.msra.mxu0 %v544
        %1013 = vmatpush.msra.mxu0 %v540
        %1014 = vmatpush.msra.mxu0 %v536
        %1015 = vmatpush.msra.mxu0 %v532
        %1016 = vmatpush.msra.mxu0 %v528
        %1017 = vmatpush.msra.mxu0 %v524
        %1018 = vmatpush.msra.mxu0 %v520
        %1019 = vmatpush.msra.mxu0 %v516
        %1020 = vmatpush.msra.mxu0 %v512
        %1021 = vmatpush.msra.mxu0 %v508
        %1022 = vmatpush.msra.mxu0 %v504
        %1023 = vmatpush.msra.mxu0 %v500
        %1024 = vmatpush.msra.mxu0 %v496
        %1025 = vmatpush.msra.mxu0 %v492
        %1026 = vmatpush.msra.mxu0 %v488
        %1027 = vmatmul.f32.gmra.mxu0 %v265
        %v1028 = vpop.f32.mrf.mxu0
        %v1029 = vadd.f32 %v988, %v1028
        %1030 = vmatmul.f32.gmra.mxu0 %v269
        %v1031 = vpop.f32.mrf.mxu0
        %v1032 = vadd.f32 %v991, %v1031
        %1033 = vmatmul.f32.gmra.mxu0 %v273
        %v1034 = vpop.f32.mrf.mxu0
        %v1035 = vadd.f32 %v994, %v1034
        %1036 = vmatmul.f32.gmra.mxu0 %v277
        %v1037 = vpop.f32.mrf.mxu0
        %v1038 = vadd.f32 %v997, %v1037
        %1039 = vmatmul.f32.gmra.mxu0 %v281
        %v1040 = vpop.f32.mrf.mxu0
        %v1041 = vadd.f32 %v1000, %v1040
        %1042 = vmatmul.f32.gmra.mxu0 %v285
        %v1043 = vpop.f32.mrf.mxu0
        %v1044 = vadd.f32 %v1003, %v1043
        %1045 = vmatmul.f32.gmra.mxu0 %v289
        %v1046 = vpop.f32.mrf.mxu0
        %v1047 = vadd.f32 %v1006, %v1046
        %1048 = vmatmul.f32.gmra.mxu0 %v293
        %v1049 = vpop.f32.mrf.mxu0
        %v1050 = vadd.f32 %v1009, %v1049
        %1051 = vdwg.mxu0
        %1052 = vmatpush.msra.mxu0 %v357
        %1053 = vmatpush.msra.mxu0 %v353
        %1054 = vmatpush.msra.mxu0 %v349
        %1055 = vmatpush.msra.mxu0 %v345
        %1056 = vmatpush.msra.mxu0 %v341
        %1057 = vmatpush.msra.mxu0 %v337
        %1058 = vmatpush.msra.mxu0 %v333
        %1059 = vmatpush.msra.mxu0 %v329
        %1060 = vmatpush.msra.mxu0 %v325
        %1061 = vmatpush.msra.mxu0 %v321
        %1062 = vmatpush.msra.mxu0 %v317
        %1063 = vmatpush.msra.mxu0 %v313
        %1064 = vmatpush.msra.mxu0 %v309
        %1065 = vmatpush.msra.mxu0 %v305
        %1066 = vmatpush.msra.mxu0 %v301
        %1067 = vmatpush.msra.mxu0 %v297
        %1068 = vmatmul.f32.gmra.mxu0 %v262
        %v1069 = vpop.f32.mrf.mxu0
        %v1070 = vadd.f32 %v555, %v1069
        %1071 = vmatmul.f32.gmra.mxu0 %v266
        %v1072 = vpop.f32.mrf.mxu0
        %v1073 = vadd.f32 %v555, %v1072
        %1074 = vmatmul.f32.gmra.mxu0 %v270
        %v1075 = vpop.f32.mrf.mxu0
        %v1076 = vadd.f32 %v555, %v1075
        %1077 = vmatmul.f32.gmra.mxu0 %v274
        %v1078 = vpop.f32.mrf.mxu0
        %v1079 = vadd.f32 %v555, %v1078
        %1080 = vmatmul.f32.gmra.mxu0 %v278
        %v1081 = vpop.f32.mrf.mxu0
        %v1082 = vadd.f32 %v555, %v1081
        %1083 = vmatmul.f32.gmra.mxu0 %v282
        %v1084 = vpop.f32.mrf.mxu0
        %v1085 = vadd.f32 %v555, %v1084
        %1086 = vmatmul.f32.gmra.mxu0 %v286
        %v1087 = vpop.f32.mrf.mxu0
        %v1088 = vadd.f32 %v555, %v1087
        %1089 = vmatmul.f32.gmra.mxu0 %v290
        %v1090 = vpop.f32.mrf.mxu0
        %v1091 = vadd.f32 %v555, %v1090
        %1092 = vdwg.mxu0
        %1093 = vmatpush.msra.mxu0 %v421
        %1094 = vmatpush.msra.mxu0 %v417
        %1095 = vmatpush.msra.mxu0 %v413
        %1096 = vmatpush.msra.mxu0 %v409
        %1097 = vmatpush.msra.mxu0 %v405
        %1098 = vmatpush.msra.mxu0 %v401
        %1099 = vmatpush.msra.mxu0 %v397
        %1100 = vmatpush.msra.mxu0 %v393
        %1101 = vmatpush.msra.mxu0 %v389
        %1102 = vmatpush.msra.mxu0 %v385
        %1103 = vmatpush.msra.mxu0 %v381
        %1104 = vmatpush.msra.mxu0 %v377
        %1105 = vmatpush.msra.mxu0 %v373
        %1106 = vmatpush.msra.mxu0 %v369
        %1107 = vmatpush.msra.mxu0 %v365
        %1108 = vmatpush.msra.mxu0 %v361
        %1109 = vmatmul.f32.gmra.mxu0 %v263
        %v1110 = vpop.f32.mrf.mxu0
        %v1111 = vadd.f32 %v1070, %v1110
        %1112 = vmatmul.f32.gmra.mxu0 %v267
        %v1113 = vpop.f32.mrf.mxu0
        %v1114 = vadd.f32 %v1073, %v1113
        %1115 = vmatmul.f32.gmra.mxu0 %v271
        %v1116 = vpop.f32.mrf.mxu0
        %v1117 = vadd.f32 %v1076, %v1116
        %1118 = vmatmul.f32.gmra.mxu0 %v275
        %v1119 = vpop.f32.mrf.mxu0
        %v1120 = vadd.f32 %v1079, %v1119
        %1121 = vmatmul.f32.gmra.mxu0 %v279
        %v1122 = vpop.f32.mrf.mxu0
        %v1123 = vadd.f32 %v1082, %v1122
        %1124 = vmatmul.f32.gmra.mxu0 %v283
        %v1125 = vpop.f32.mrf.mxu0
        %v1126 = vadd.f32 %v1085, %v1125
        %1127 = vmatmul.f32.gmra.mxu0 %v287
        %v1128 = vpop.f32.mrf.mxu0
        %v1129 = vadd.f32 %v1088, %v1128
        %1130 = vmatmul.f32.gmra.mxu0 %v291
        %v1131 = vpop.f32.mrf.mxu0
        %v1132 = vadd.f32 %v1091, %v1131
        %1133 = vdwg.mxu0
        %1134 = vmatpush.msra.mxu0 %v485
        %1135 = vmatpush.msra.mxu0 %v481
        %1136 = vmatpush.msra.mxu0 %v477
        %1137 = vmatpush.msra.mxu0 %v473
        %1138 = vmatpush.msra.mxu0 %v469
        %1139 = vmatpush.msra.mxu0 %v465
        %1140 = vmatpush.msra.mxu0 %v461
        %1141 = vmatpush.msra.mxu0 %v457
        %1142 = vmatpush.msra.mxu0 %v453
        %1143 = vmatpush.msra.mxu0 %v449
        %1144 = vmatpush.msra.mxu0 %v445
        %1145 = vmatpush.msra.mxu0 %v441
        %1146 = vmatpush.msra.mxu0 %v437
        %1147 = vmatpush.msra.mxu0 %v433
        %1148 = vmatpush.msra.mxu0 %v429
        %1149 = vmatpush.msra.mxu0 %v425
        %1150 = vmatmul.f32.gmra.mxu0 %v264
        %v1151 = vpop.f32.mrf.mxu0
        %v1152 = vadd.f32 %v1111, %v1151
        %1153 = vmatmul.f32.gmra.mxu0 %v268
        %v1154 = vpop.f32.mrf.mxu0
        %v1155 = vadd.f32 %v1114, %v1154
        %1156 = vmatmul.f32.gmra.mxu0 %v272
        %v1157 = vpop.f32.mrf.mxu0
        %v1158 = vadd.f32 %v1117, %v1157
        %1159 = vmatmul.f32.gmra.mxu0 %v276
        %v1160 = vpop.f32.mrf.mxu0
        %v1161 = vadd.f32 %v1120, %v1160
        %1162 = vmatmul.f32.gmra.mxu0 %v280
        %v1163 = vpop.f32.mrf.mxu0
        %v1164 = vadd.f32 %v1123, %v1163
        %1165 = vmatmul.f32.gmra.mxu0 %v284
        %v1166 = vpop.f32.mrf.mxu0
        %v1167 = vadd.f32 %v1126, %v1166
        %1168 = vmatmul.f32.gmra.mxu0 %v288
        %v1169 = vpop.f32.mrf.mxu0
        %v1170 = vadd.f32 %v1129, %v1169
        %1171 = vmatmul.f32.gmra.mxu0 %v292
        %v1172 = vpop.f32.mrf.mxu0
        %v1173 = vadd.f32 %v1132, %v1172
        %1174 = vdwg.mxu0
        %1175 = vmatpush.msra.mxu0 %v549
        %1176 = vmatpush.msra.mxu0 %v545
        %1177 = vmatpush.msra.mxu0 %v541
        %1178 = vmatpush.msra.mxu0 %v537
        %1179 = vmatpush.msra.mxu0 %v533
        %1180 = vmatpush.msra.mxu0 %v529
        %1181 = vmatpush.msra.mxu0 %v525
        %1182 = vmatpush.msra.mxu0 %v521
        %1183 = vmatpush.msra.mxu0 %v517
        %1184 = vmatpush.msra.mxu0 %v513
        %1185 = vmatpush.msra.mxu0 %v509
        %1186 = vmatpush.msra.mxu0 %v505
        %1187 = vmatpush.msra.mxu0 %v501
        %1188 = vmatpush.msra.mxu0 %v497
        %1189 = vmatpush.msra.mxu0 %v493
        %1190 = vmatpush.msra.mxu0 %v489
        %1191 = vmatmul.f32.gmra.mxu0 %v265
        %v1192 = vpop.f32.mrf.mxu0
        %v1193 = vadd.f32 %v1152, %v1192
        %1194 = vmatmul.f32.gmra.mxu0 %v269
        %v1195 = vpop.f32.mrf.mxu0
        %v1196 = vadd.f32 %v1155, %v1195
        %1197 = vmatmul.f32.gmra.mxu0 %v273
        %v1198 = vpop.f32.mrf.mxu0
        %v1199 = vadd.f32 %v1158, %v1198
        %1200 = vmatmul.f32.gmra.mxu0 %v277
        %v1201 = vpop.f32.mrf.mxu0
        %v1202 = vadd.f32 %v1161, %v1201
        %1203 = vmatmul.f32.gmra.mxu0 %v281
        %v1204 = vpop.f32.mrf.mxu0
        %v1205 = vadd.f32 %v1164, %v1204
        %1206 = vmatmul.f32.gmra.mxu0 %v285
        %v1207 = vpop.f32.mrf.mxu0
        %v1208 = vadd.f32 %v1167, %v1207
        %1209 = vmatmul.f32.gmra.mxu0 %v289
        %v1210 = vpop.f32.mrf.mxu0
        %v1211 = vadd.f32 %v1170, %v1210
        %1212 = vmatmul.f32.gmra.mxu0 %v293
        %v1213 = vpop.f32.mrf.mxu0
        %v1214 = vadd.f32 %v1173, %v1213
        %1215 = vdwg.mxu0
        %v1216 = vmax.f32 %v701, 0.0
        %v1217 = vmax.f32 %v865, 0.0
        %v1218 = vmax.f32 %v1029, 0.0
        %v1219 = vmax.f32 %v1193, 0.0
        %v1220 = vmax.f32 %v704, 0.0
        %v1221 = vmax.f32 %v868, 0.0
        %v1222 = vmax.f32 %v1032, 0.0
        %v1223 = vmax.f32 %v1196, 0.0
        %v1224 = vmax.f32 %v707, 0.0
        %v1225 = vmax.f32 %v871, 0.0
        %v1226 = vmax.f32 %v1035, 0.0
        %v1227 = vmax.f32 %v1199, 0.0
        %v1228 = vmax.f32 %v710, 0.0
        %v1229 = vmax.f32 %v874, 0.0
        %v1230 = vmax.f32 %v1038, 0.0
        %v1231 = vmax.f32 %v1202, 0.0
        %v1232 = vmax.f32 %v713, 0.0
        %v1233 = vmax.f32 %v877, 0.0
        %v1234 = vmax.f32 %v1041, 0.0
        %v1235 = vmax.f32 %v1205, 0.0
        %v1236 = vmax.f32 %v716, 0.0
        %v1237 = vmax.f32 %v880, 0.0
        %v1238 = vmax.f32 %v1044, 0.0
        %v1239 = vmax.f32 %v1208, 0.0
        %v1240 = vmax.f32 %v719, 0.0
        %v1241 = vmax.f32 %v883, 0.0
        %v1242 = vmax.f32 %v1047, 0.0
        %v1243 = vmax.f32 %v1211, 0.0
        %v1244 = vmax.f32 %v722, 0.0
        %v1245 = vmax.f32 %v886, 0.0
        %v1246 = vmax.f32 %v1050, 0.0
        %v1247 = vmax.f32 %v1214, 0.0
        %v1248 = vld [vmem:[%s3] sm:$0xff]
        %v1249 = vld [vmem:[%s3 + $0x8] sm:$0xff]
        %v1250 = vld [vmem:[%s3 + $0x10] sm:$0xff]
        %v1251 = vld [vmem:[%s3 + $0x18] sm:$0xff]
        %v1252 = vld [vmem:[%s3 + $0x20] sm:$0xff]
        %v1253 = vld [vmem:[%s3 + $0x28] sm:$0xff]
        %v1254 = vld [vmem:[%s3 + $0x30] sm:$0xff]
        %v1255 = vld [vmem:[%s3 + $0x38] sm:$0xff]
        %v1256 = vld [vmem:[%s3 + $0x40] sm:$0xff]
        %v1257 = vld [vmem:[%s3 + $0x48] sm:$0xff]
        %v1258 = vld [vmem:[%s3 + $0x50] sm:$0xff]
        %v1259 = vld [vmem:[%s3 + $0x58] sm:$0xff]
        %v1260 = vld [vmem:[%s3 + $0x60] sm:$0xff]
        %v1261 = vld [vmem:[%s3 + $0x68] sm:$0xff]
        %v1262 = vld [vmem:[%s3 + $0x70] sm:$0xff]
        %v1263 = vld [vmem:[%s3 + $0x78] sm:$0xff]
        %v1264 = vld [vmem:[%s3 + $0x80] sm:$0xff]
        %v1265 = vld [vmem:[%s3 + $0x88] sm:$0xff]
        %v1266 = vld [vmem:[%s3 + $0x90] sm:$0xff]
        %v1267 = vld [vmem:[%s3 + $0x98] sm:$0xff]
        %v1268 = vld [vmem:[%s3 + $0xa0] sm:$0xff]
        %v1269 = vld [vmem:[%s3 + $0xa8] sm:$0xff]
        %v1270 = vld [vmem:[%s3 + $0xb0] sm:$0xff]
        %v1271 = vld [vmem:[%s3 + $0xb8] sm:$0xff]
        %v1272 = vld [vmem:[%s3 + $0xc0] sm:$0xff]
        %v1273 = vld [vmem:[%s3 + $0xc8] sm:$0xff]
        %v1274 = vld [vmem:[%s3 + $0xd0] sm:$0xff]
        %v1275 = vld [vmem:[%s3 + $0xd8] sm:$0xff]
        %v1276 = vld [vmem:[%s3 + $0xe0] sm:$0xff]
        %v1277 = vld [vmem:[%s3 + $0xe8] sm:$0xff]
        %v1278 = vld [vmem:[%s3 + $0xf0] sm:$0xff]
        %v1279 = vld [vmem:[%s3 + $0xf8] sm:$0xff]
        %v1280 = vld [vmem:[%s3 + $0x100] sm:$0xff]
        %v1281 = vld [vmem:[%s3 + $0x108] sm:$0xff]
        %v1282 = vld [vmem:[%s3 + $0x110] sm:$0xff]
        %v1283 = vld [vmem:[%s3 + $0x118] sm:$0xff]
        %v1284 = vld [vmem:[%s3 + $0x120] sm:$0xff]
        %v1285 = vld [vmem:[%s3 + $0x128] sm:$0xff]
        %v1286 = vld [vmem:[%s3 + $0x130] sm:$0xff]
        %v1287 = vld [vmem:[%s3 + $0x138] sm:$0xff]
        %v1288 = vld [vmem:[%s3 + $0x140] sm:$0xff]
        %v1289 = vld [vmem:[%s3 + $0x148] sm:$0xff]
        %v1290 = vld [vmem:[%s3 + $0x150] sm:$0xff]
        %v1291 = vld [vmem:[%s3 + $0x158] sm:$0xff]
        %v1292 = vld [vmem:[%s3 + $0x160] sm:$0xff]
        %v1293 = vld [vmem:[%s3 + $0x168] sm:$0xff]
        %v1294 = vld [vmem:[%s3 + $0x170] sm:$0xff]
        %v1295 = vld [vmem:[%s3 + $0x178] sm:$0xff]
        %v1296 = vld [vmem:[%s3 + $0x180] sm:$0xff]
        %v1297 = vld [vmem:[%s3 + $0x188] sm:$0xff]
        %v1298 = vld [vmem:[%s3 + $0x190] sm:$0xff]
        %v1299 = vld [vmem:[%s3 + $0x198] sm:$0xff]
        %v1300 = vld [vmem:[%s3 + $0x1a0] sm:$0xff]
        %v1301 = vld [vmem:[%s3 + $0x1a8] sm:$0xff]
        %v1302 = vld [vmem:[%s3 + $0x1b0] sm:$0xff]
        %v1303 = vld [vmem:[%s3 + $0x1b8] sm:$0xff]
        %v1304 = vld [vmem:[%s3 + $0x1c0] sm:$0xff]
        %v1305 = vld [vmem:[%s3 + $0x1c8] sm:$0xff]
        %v1306 = vld [vmem:[%s3 + $0x1d0] sm:$0xff]
        %v1307 = vld [vmem:[%s3 + $0x1d8] sm:$0xff]
        %v1308 = vld [vmem:[%s3 + $0x1e0] sm:$0xff]
        %v1309 = vld [vmem:[%s3 + $0x1e8] sm:$0xff]
        %v1310 = vld [vmem:[%s3 + $0x1f0] sm:$0xff]
        %v1311 = vld [vmem:[%s3 + $0x1f8] sm:$0xff]
        %v1312 = vld [vmem:[%s4] sm:$0x1]
        %v1314 = vperm.slane %v1312, 0
        %1316 = vmatpush.msra.mxu0 %v1263
        %1317 = vmatpush.msra.mxu0 %v1262
        %1318 = vmatpush.msra.mxu0 %v1261
        %1319 = vmatpush.msra.mxu0 %v1260
        %1320 = vmatpush.msra.mxu0 %v1259
        %1321 = vmatpush.msra.mxu0 %v1258
        %1322 = vmatpush.msra.mxu0 %v1257
        %1323 = vmatpush.msra.mxu0 %v1256
        %1324 = vmatpush.msra.mxu0 %v1255
        %1325 = vmatpush.msra.mxu0 %v1254
        %1326 = vmatpush.msra.mxu0 %v1253
        %1327 = vmatpush.msra.mxu0 %v1252
        %1328 = vmatpush.msra.mxu0 %v1251
        %1329 = vmatpush.msra.mxu0 %v1250
        %1330 = vmatpush.msra.mxu0 %v1249
        %1331 = vmatpush.msra.mxu0 %v1248
        %1332 = vmatmul.f32.gmra.mxu0 %v1216
        %v1333 = vpop.f32.mrf.mxu0
        %v1334 = vadd.f32 %v1314, %v1333
        %1335 = vmatmul.f32.gmra.mxu0 %v1220
        %v1336 = vpop.f32.mrf.mxu0
        %v1337 = vadd.f32 %v1314, %v1336
        %1338 = vmatmul.f32.gmra.mxu0 %v1224
        %v1339 = vpop.f32.mrf.mxu0
        %v1340 = vadd.f32 %v1314, %v1339
        %1341 = vmatmul.f32.gmra.mxu0 %v1228
        %v1342 = vpop.f32.mrf.mxu0
        %v1343 = vadd.f32 %v1314, %v1342
        %1344 = vmatmul.f32.gmra.mxu0 %v1232
        %v1345 = vpop.f32.mrf.mxu0
        %v1346 = vadd.f32 %v1314, %v1345
        %1347 = vmatmul.f32.gmra.mxu0 %v1236
        %v1348 = vpop.f32.mrf.mxu0
        %v1349 = vadd.f32 %v1314, %v1348
        %1350 = vmatmul.f32.gmra.mxu0 %v1240
        %v1351 = vpop.f32.mrf.mxu0
        %v1352 = vadd.f32 %v1314, %v1351
        %1353 = vmatmul.f32.gmra.mxu0 %v1244
        %v1354 = vpop.f32.mrf.mxu0
        %v1355 = vadd.f32 %v1314, %v1354
        %1356 = vdwg.mxu0
        %1357 = vmatpush.msra.mxu0 %v1279
        %1358 = vmatpush.msra.mxu0 %v1278
        %1359 = vmatpush.msra.mxu0 %v1277
        %1360 = vmatpush.msra.mxu0 %v1276
        %1361 = vmatpush.msra.mxu0 %v1275
        %1362 = vmatpush.msra.mxu0 %v1274
        %1363 = vmatpush.msra.mxu0 %v1273
        %1364 = vmatpush.msra.mxu0 %v1272
        %1365 = vmatpush.msra.mxu0 %v1271
        %1366 = vmatpush.msra.mxu0 %v1270
        %1367 = vmatpush.msra.mxu0 %v1269
        %1368 = vmatpush.msra.mxu0 %v1268
        %1369 = vmatpush.msra.mxu0 %v1267
        %1370 = vmatpush.msra.mxu0 %v1266
        %1371 = vmatpush.msra.mxu0 %v1265
        %1372 = vmatpush.msra.mxu0 %v1264
        %1373 = vmatmul.f32.gmra.mxu0 %v1217
        %v1374 = vpop.f32.mrf.mxu0
        %v1375 = vadd.f32 %v1334, %v1374
        %1376 = vmatmul.f32.gmra.mxu0 %v1221
        %v1377 = vpop.f32.mrf.mxu0
        %v1378 = vadd.f32 %v1337, %v1377
        %1379 = vmatmul.f32.gmra.mxu0 %v1225
        %v1380 = vpop.f32.mrf.mxu0
        %v1381 = vadd.f32 %v1340, %v1380
        %1382 = vmatmul.f32.gmra.mxu0 %v1229
        %v1383 = vpop.f32.mrf.mxu0
        %v1384 = vadd.f32 %v1343, %v1383
        %1385 = vmatmul.f32.gmra.mxu0 %v1233
        %v1386 = vpop.f32.mrf.mxu0
        %v1387 = vadd.f32 %v1346, %v1386
        %1388 = vmatmul.f32.gmra.mxu0 %v1237
        %v1389 = vpop.f32.mrf.mxu0
        %v1390 = vadd.f32 %v1349, %v1389
        %1391 = vmatmul.f32.gmra.mxu0 %v1241
        %v1392 = vpop.f32.mrf.mxu0
        %v1393 = vadd.f32 %v1352, %v1392
        %1394 = vmatmul.f32.gmra.mxu0 %v1245
        %v1395 = vpop.f32.mrf.mxu0
        %v1396 = vadd.f32 %v1355, %v1395
        %1397 = vdwg.mxu0
        %1398 = vmatpush.msra.mxu0 %v1295
        %1399 = vmatpush.msra.mxu0 %v1294
        %1400 = vmatpush.msra.mxu0 %v1293
        %1401 = vmatpush.msra.mxu0 %v1292
        %1402 = vmatpush.msra.mxu0 %v1291
        %1403 = vmatpush.msra.mxu0 %v1290
        %1404 = vmatpush.msra.mxu0 %v1289
        %1405 = vmatpush.msra.mxu0 %v1288
        %1406 = vmatpush.msra.mxu0 %v1287
        %1407 = vmatpush.msra.mxu0 %v1286
        %1408 = vmatpush.msra.mxu0 %v1285
        %1409 = vmatpush.msra.mxu0 %v1284
        %1410 = vmatpush.msra.mxu0 %v1283
        %1411 = vmatpush.msra.mxu0 %v1282
        %1412 = vmatpush.msra.mxu0 %v1281
        %1413 = vmatpush.msra.mxu0 %v1280
        %1414 = vmatmul.f32.gmra.mxu0 %v1218
        %v1415 = vpop.f32.mrf.mxu0
        %v1416 = vadd.f32 %v1375, %v1415
        %1417 = vmatmul.f32.gmra.mxu0 %v1222
        %v1418 = vpop.f32.mrf.mxu0
        %v1419 = vadd.f32 %v1378, %v1418
        %1420 = vmatmul.f32.gmra.mxu0 %v1226
        %v1421 = vpop.f32.mrf.mxu0
        %v1422 = vadd.f32 %v1381, %v1421
        %1423 = vmatmul.f32.gmra.mxu0 %v1230
        %v1424 = vpop.f32.mrf.mxu0
        %v1425 = vadd.f32 %v1384, %v1424
        %1426 = vmatmul.f32.gmra.mxu0 %v1234
        %v1427 = vpop.f32.mrf.mxu0
        %v1428 = vadd.f32 %v1387, %v1427
        %1429 = vmatmul.f32.gmra.mxu0 %v1238
        %v1430 = vpop.f32.mrf.mxu0
        %v1431 = vadd.f32 %v1390, %v1430
        %1432 = vmatmul.f32.gmra.mxu0 %v1242
        %v1433 = vpop.f32.mrf.mxu0
        %v1434 = vadd.f32 %v1393, %v1433
        %1435 = vmatmul.f32.gmra.mxu0 %v1246
        %v1436 = vpop.f32.mrf.mxu0
        %v1437 = vadd.f32 %v1396, %v1436
        %1438 = vdwg.mxu0
        %1439 = vmatpush.msra.mxu0 %v1311
        %1440 = vmatpush.msra.mxu0 %v1310
        %1441 = vmatpush.msra.mxu0 %v1309
        %1442 = vmatpush.msra.mxu0 %v1308
        %1443 = vmatpush.msra.mxu0 %v1307
        %1444 = vmatpush.msra.mxu0 %v1306
        %1445 = vmatpush.msra.mxu0 %v1305
        %1446 = vmatpush.msra.mxu0 %v1304
        %1447 = vmatpush.msra.mxu0 %v1303
        %1448 = vmatpush.msra.mxu0 %v1302
        %1449 = vmatpush.msra.mxu0 %v1301
        %1450 = vmatpush.msra.mxu0 %v1300
        %1451 = vmatpush.msra.mxu0 %v1299
        %1452 = vmatpush.msra.mxu0 %v1298
        %1453 = vmatpush.msra.mxu0 %v1297
        %1454 = vmatpush.msra.mxu0 %v1296
        %1455 = vmatmul.f32.gmra.mxu0 %v1219
        %v1456 = vpop.f32.mrf.mxu0
        %v1457 = vadd.f32 %v1416, %v1456
        %1458 = vmatmul.f32.gmra.mxu0 %v1223
        %v1459 = vpop.f32.mrf.mxu0
        %v1460 = vadd.f32 %v1419, %v1459
        %1461 = vmatmul.f32.gmra.mxu0 %v1227
        %v1462 = vpop.f32.mrf.mxu0
        %v1463 = vadd.f32 %v1422, %v1462
        %1464 = vmatmul.f32.gmra.mxu0 %v1231
        %v1465 = vpop.f32.mrf.mxu0
        %v1466 = vadd.f32 %v1425, %v1465
        %1467 = vmatmul.f32.gmra.mxu0 %v1235
        %v1468 = vpop.f32.mrf.mxu0
        %v1469 = vadd.f32 %v1428, %v1468
        %1470 = vmatmul.f32.gmra.mxu0 %v1239
        %v1471 = vpop.f32.mrf.mxu0
        %v1472 = vadd.f32 %v1431, %v1471
        %1473 = vmatmul.f32.gmra.mxu0 %v1243
        %v1474 = vpop.f32.mrf.mxu0
        %v1475 = vadd.f32 %v1434, %v1474
        %1476 = vmatmul.f32.gmra.mxu0 %v1247
        %v1477 = vpop.f32.mrf.mxu0
        %v1478 = vadd.f32 %v1437, %v1477
        %1479 = vdwg.mxu0
        %v1480 = vmul.f32 %v1457, %v1457
        %v1481 = vmul.f32 %v1460, %v1460
        %v1482 = vmul.f32 %v1463, %v1463
        %v1483 = vmul.f32 %v1466, %v1466
        %v1484 = vmul.f32 %v1469, %v1469
        %v1485 = vmul.f32 %v1472, %v1472
        %v1486 = vmul.f32 %v1475, %v1475
        %v1487 = vmul.f32 %v1478, %v1478
        %1488 = vadd.xlane.f32.xlu0 %v1480
        %v1489 = vpop.xlane.xlu0 %1488
        %1490 = vadd.xlane.f32.xlu0 %v1481
        %v1491 = vpop.xlane.xlu0 %1490
        %1492 = vadd.xlane.f32.xlu0 %v1482
        %v1493 = vpop.xlane.xlu0 %1492
        %1494 = vadd.xlane.f32.xlu0 %v1483
        %v1495 = vpop.xlane.xlu0 %1494
        %1496 = vadd.xlane.f32.xlu0 %v1484
        %v1497 = vpop.xlane.xlu0 %1496
        %1498 = vadd.xlane.f32.xlu0 %v1485
        %v1499 = vpop.xlane.xlu0 %1498
        %1500 = vadd.xlane.f32.xlu0 %v1486
        %v1501 = vpop.xlane.xlu0 %1500
        %1502 = vadd.xlane.f32.xlu0 %v1487
        %v1503 = vpop.xlane.xlu0 %1502
        %v1504 = vmax.f32 %v1489, 1e-24
        %v1505 = vmax.f32 %v1491, 1e-24
        %v1506 = vmax.f32 %v1493, 1e-24
        %v1507 = vmax.f32 %v1495, 1e-24
        %v1508 = vmax.f32 %v1497, 1e-24
        %v1509 = vmax.f32 %v1499, 1e-24
        %v1510 = vmax.f32 %v1501, 1e-24
        %v1511 = vmax.f32 %v1503, 1e-24
        %v1512 = vrsqrt.pop %v1504
        %v1513 = vmul.f32 %v1512, %v1504
        %v1514 = vmul.f32 %v1513, %v1512
        %v1515 = vmul.f32 0.5, %v1514
        %v1516 = vsub.f32 1.5, %v1515
        %v1517 = vmul.f32 %v1512, %v1516
        %vm1518 = vweird.f32 %v1504
        %vm1519 = vweird.f32 %v1512
        %vm1520 = vmor %vm1518, %vm1519
        %v1521 = vsel %vm1520, %v1512, %v1517
        %v1522 = vrsqrt.pop %v1505
        %v1523 = vmul.f32 %v1522, %v1505
        %v1524 = vmul.f32 %v1523, %v1522
        %v1525 = vmul.f32 0.5, %v1524
        %v1526 = vsub.f32 1.5, %v1525
        %v1527 = vmul.f32 %v1522, %v1526
        %vm1528 = vweird.f32 %v1505
        %vm1529 = vweird.f32 %v1522
        %vm1530 = vmor %vm1528, %vm1529
        %v1531 = vsel %vm1530, %v1522, %v1527
        %v1532 = vrsqrt.pop %v1506
        %v1533 = vmul.f32 %v1532, %v1506
        %v1534 = vmul.f32 %v1533, %v1532
        %v1535 = vmul.f32 0.5, %v1534
        %v1536 = vsub.f32 1.5, %v1535
        %v1537 = vmul.f32 %v1532, %v1536
        %vm1538 = vweird.f32 %v1506
        %vm1539 = vweird.f32 %v1532
        %vm1540 = vmor %vm1538, %vm1539
        %v1541 = vsel %vm1540, %v1532, %v1537
        %v1542 = vrsqrt.pop %v1507
        %v1543 = vmul.f32 %v1542, %v1507
        %v1544 = vmul.f32 %v1543, %v1542
        %v1545 = vmul.f32 0.5, %v1544
        %v1546 = vsub.f32 1.5, %v1545
        %v1547 = vmul.f32 %v1542, %v1546
        %vm1548 = vweird.f32 %v1507
        %vm1549 = vweird.f32 %v1542
        %vm1550 = vmor %vm1548, %vm1549
        %v1551 = vsel %vm1550, %v1542, %v1547
        %v1552 = vrsqrt.pop %v1508
        %v1553 = vmul.f32 %v1552, %v1508
        %v1554 = vmul.f32 %v1553, %v1552
        %v1555 = vmul.f32 0.5, %v1554
        %v1556 = vsub.f32 1.5, %v1555
        %v1557 = vmul.f32 %v1552, %v1556
        %vm1558 = vweird.f32 %v1508
        %vm1559 = vweird.f32 %v1552
        %vm1560 = vmor %vm1558, %vm1559
        %v1561 = vsel %vm1560, %v1552, %v1557
        %v1562 = vrsqrt.pop %v1509
        %v1563 = vmul.f32 %v1562, %v1509
        %v1564 = vmul.f32 %v1563, %v1562
        %v1565 = vmul.f32 0.5, %v1564
        %v1566 = vsub.f32 1.5, %v1565
        %v1567 = vmul.f32 %v1562, %v1566
        %vm1568 = vweird.f32 %v1509
        %vm1569 = vweird.f32 %v1562
        %vm1570 = vmor %vm1568, %vm1569
        %v1571 = vsel %vm1570, %v1562, %v1567
        %v1572 = vrsqrt.pop %v1510
        %v1573 = vmul.f32 %v1572, %v1510
        %v1574 = vmul.f32 %v1573, %v1572
        %v1575 = vmul.f32 0.5, %v1574
        %v1576 = vsub.f32 1.5, %v1575
        %v1577 = vmul.f32 %v1572, %v1576
        %vm1578 = vweird.f32 %v1510
        %vm1579 = vweird.f32 %v1572
        %vm1580 = vmor %vm1578, %vm1579
        %v1581 = vsel %vm1580, %v1572, %v1577
        %v1582 = vrsqrt.pop %v1511
        %v1583 = vmul.f32 %v1582, %v1511
        %v1584 = vmul.f32 %v1583, %v1582
        %v1585 = vmul.f32 0.5, %v1584
        %v1586 = vsub.f32 1.5, %v1585
        %v1587 = vmul.f32 %v1582, %v1586
        %vm1588 = vweird.f32 %v1511
        %vm1589 = vweird.f32 %v1582
        %vm1590 = vmor %vm1588, %vm1589
        %v1591 = vsel %vm1590, %v1582, %v1587
        %v1592 = vmul.f32 %v1457, %v1521
        %v1593 = vmul.f32 %v1460, %v1531
        %v1594 = vmul.f32 %v1463, %v1541
        %v1595 = vmul.f32 %v1466, %v1551
        %v1596 = vmul.f32 %v1469, %v1561
        %v1597 = vmul.f32 %v1472, %v1571
        %v1598 = vmul.f32 %v1475, %v1581
        %v1599 = vmul.f32 %v1478, %v1591
        %1600 = vst [vmem:[%s245] sm:$0xff] %v1592
        %1601 = vst [vmem:[%s245 + $0x8] sm:$0xff] %v1593
        %1602 = vst [vmem:[%s245 + $0x10] sm:$0xff] %v1594
        %1603 = vst [vmem:[%s245 + $0x18] sm:$0xff] %v1595
        %1604 = vst [vmem:[%s245 + $0x20] sm:$0xff] %v1596
        %1605 = vst [vmem:[%s245 + $0x28] sm:$0xff] %v1597
        %1606 = vst [vmem:[%s245 + $0x30] sm:$0xff] %v1598
        %1607 = vst [vmem:[%s245 + $0x38] sm:$0xff] %v1599
        %v1608 = vpack.c.bf16 %v1593, %v1592
        %v1609 = vpack.c.bf16 %v1595, %v1594
        %v1610 = vpack.c.bf16 %v1597, %v1596
        %v1611 = vpack.c.bf16 %v1599, %v1598
        %1612 = vmatpush.bf16.xpose.msra.mxu0 0
        %1613 = vmatpush.bf16.xpose.msra.mxu0 0
        %1614 = vmatpush.bf16.xpose.msra.mxu0 0
        %1615 = vmatpush.bf16.xpose.msra.mxu0 0
        %1616 = vmatpush.bf16.xpose.msra.mxu0 %v1611
        %1617 = vmatpush.bf16.xpose.msra.mxu0 %v1610
        %1618 = vmatpush.bf16.xpose.msra.mxu0 %v1609
        %1619 = vmatpush.bf16.xpose.msra.mxu0 %v1608
        %1620 = vmatmul.bf16.gmra.mxu0 %v1608
        %v1621 = vpop.f32.mrf.mxu0
        %v1622 = vadd.f32 0.0, %v1621
        %v1623 = vpop.f32.mrf.mxu0
        %v1624 = vadd.f32 0.0, %v1623
        %1625 = vmatmul.bf16.gmra.mxu0 %v1609
        %v1626 = vpop.f32.mrf.mxu0
        %v1627 = vadd.f32 0.0, %v1626
        %v1628 = vpop.f32.mrf.mxu0
        %v1629 = vadd.f32 0.0, %v1628
        %1630 = vmatmul.bf16.gmra.mxu0 %v1610
        %v1631 = vpop.f32.mrf.mxu0
        %v1632 = vadd.f32 0.0, %v1631
        %v1633 = vpop.f32.mrf.mxu0
        %v1634 = vadd.f32 0.0, %v1633
        %1635 = vmatmul.bf16.gmra.mxu0 %v1611
        %v1636 = vpop.f32.mrf.mxu0
        %v1637 = vadd.f32 0.0, %v1636
        %v1638 = vpop.f32.mrf.mxu0
        %v1639 = vadd.f32 0.0, %v1638
        %1640 = vdwg.mxu0
        %v1641 = vmul.f32 %v1622, 14.285714
        %v1642 = vmul.f32 %v1624, 14.285714
        %v1643 = vmul.f32 %v1627, 14.285714
        %v1644 = vmul.f32 %v1629, 14.285714
        %v1645 = vmul.f32 %v1632, 14.285714
        %v1646 = vmul.f32 %v1634, 14.285714
        %v1647 = vmul.f32 %v1637, 14.285714
        %v1648 = vmul.f32 %v1639, 14.285714
        %vm1649 = vcmask 261248
        %v1650 = vsel %vm1649, %v1641, -inf
        %1651 = vmax.xlane.f32.xlu0 %v1650
        %v1652 = vpop.xlane.xlu0 %1651
        %v1653 = vsel %vm1649, %v1642, -inf
        %1654 = vmax.xlane.f32.xlu0 %v1653
        %v1655 = vpop.xlane.xlu0 %1654
        %v1656 = vsub.f32 %v1641, %v1652
        %v1657 = vsub.f32 %v1642, %v1655
        %v1658 = vmul.f32 %v1656, 1.442695
        %v1659 = vpow.pop %v1658
        %v1660 = vmul.f32 %v1657, 1.442695
        %v1661 = vpow.pop %v1660
        %1664 = vrot.lane.b32.xlu0 %v1659, 112
        %v1665 = vpop.permute.xlu0 %1664
        %1666 = vrot.lane.b32.xlu0 %v1661, 112
        %v1667 = vpop.permute.xlu0 %1666
        %vm1670 = vcmask 130048
        %v1671 = vsel %vm1670, %v1665, 0.0
        %1672 = vadd.xlane.f32.xlu0 %v1671
        %v1673 = vpop.xlane.xlu0 %1672
        %v1674 = vsel %vm1670, %v1667, 0.0
        %1675 = vadd.xlane.f32.xlu0 %v1674
        %v1676 = vpop.xlane.xlu0 %1675
        %v1677 = vrcp.pop %v1673
        %v1678 = vmul.f32 %v1673, %v1677
        %v1679 = vsub.f32 1.0, %v1678
        %v1680 = vmul.f32 %v1677, %v1679
        %v1681 = vadd.f32 %v1677, %v1680
        %vm1682 = vweird.f32 %v1673
        %vm1683 = vweird.f32 %v1677
        %vm1684 = vmor %vm1682, %vm1683
        %v1685 = vsel %vm1684, %v1677, %v1681
        %v1686 = vand.u32 2147483647, %v1673
        %vm1687 = vcmp.eq.f32.partialorder %v1686, 8.507059e+37
        %v1688 = vand.u32 %v1673, 2147483648
        %v1689 = vor.u32 1.1754944e-38, %v1688
        %v1690 = vsel %vm1687, %v1689, %v1685
        %v1691 = vmul.f32 %v1659, %v1690
        %v1692 = vrcp.pop %v1676
        %v1693 = vmul.f32 %v1676, %v1692
        %v1694 = vsub.f32 1.0, %v1693
        %v1695 = vmul.f32 %v1692, %v1694
        %v1696 = vadd.f32 %v1692, %v1695
        %vm1697 = vweird.f32 %v1676
        %vm1698 = vweird.f32 %v1692
        %vm1699 = vmor %vm1697, %vm1698
        %v1700 = vsel %vm1699, %v1692, %v1696
        %v1701 = vand.u32 2147483647, %v1676
        %vm1702 = vcmp.eq.f32.partialorder %v1701, 8.507059e+37
        %v1703 = vand.u32 %v1676, 2147483648
        %v1704 = vor.u32 1.1754944e-38, %v1703
        %v1705 = vsel %vm1702, %v1704, %v1700
        %v1706 = vmul.f32 %v1661, %v1705
        %v1707 = vsel %vm1670, %v1643, -inf
        %1708 = vmax.xlane.f32.xlu0 %v1707
        %v1709 = vpop.xlane.xlu0 %1708
        %v1710 = vsel %vm1670, %v1644, -inf
        %1711 = vmax.xlane.f32.xlu0 %v1710
        %v1712 = vpop.xlane.xlu0 %1711
        %v1713 = vsub.f32 %v1643, %v1709
        %v1714 = vsub.f32 %v1644, %v1712
        %v1715 = vmul.f32 %v1713, 1.442695
        %v1716 = vpow.pop %v1715
        %v1717 = vmul.f32 %v1714, 1.442695
        %v1718 = vpow.pop %v1717
        %v1719 = vsel %vm1670, %v1716, 0.0
        %1720 = vadd.xlane.f32.xlu0 %v1719
        %v1721 = vpop.xlane.xlu0 %1720
        %v1722 = vsel %vm1670, %v1718, 0.0
        %1723 = vadd.xlane.f32.xlu0 %v1722
        %v1724 = vpop.xlane.xlu0 %1723
        %v1725 = vrcp.pop %v1721
        %v1726 = vmul.f32 %v1721, %v1725
        %v1727 = vsub.f32 1.0, %v1726
        %v1728 = vmul.f32 %v1725, %v1727
        %v1729 = vadd.f32 %v1725, %v1728
        %vm1730 = vweird.f32 %v1721
        %vm1731 = vweird.f32 %v1725
        %vm1732 = vmor %vm1730, %vm1731
        %v1733 = vsel %vm1732, %v1725, %v1729
        %v1734 = vand.u32 2147483647, %v1721
        %vm1735 = vcmp.eq.f32.partialorder %v1734, 8.507059e+37
        %v1736 = vand.u32 %v1721, 2147483648
        %v1737 = vor.u32 1.1754944e-38, %v1736
        %v1738 = vsel %vm1735, %v1737, %v1733
        %v1739 = vmul.f32 %v1716, %v1738
        %v1740 = vrcp.pop %v1724
        %v1741 = vmul.f32 %v1724, %v1740
        %v1742 = vsub.f32 1.0, %v1741
        %v1743 = vmul.f32 %v1740, %v1742
        %v1744 = vadd.f32 %v1740, %v1743
        %vm1745 = vweird.f32 %v1724
        %vm1746 = vweird.f32 %v1740
        %vm1747 = vmor %vm1745, %vm1746
        %v1748 = vsel %vm1747, %v1740, %v1744
        %v1749 = vand.u32 2147483647, %v1724
        %vm1750 = vcmp.eq.f32.partialorder %v1749, 8.507059e+37
        %v1751 = vand.u32 %v1724, 2147483648
        %v1752 = vor.u32 1.1754944e-38, %v1751
        %v1753 = vsel %vm1750, %v1752, %v1748
        %v1754 = vmul.f32 %v1718, %v1753
        %vm1755 = vcmask 392448
        %v1756 = vsel %vm1755, %v1643, -inf
        %1757 = vmax.xlane.f32.xlu0 %v1756
        %v1758 = vpop.xlane.xlu0 %1757
        %v1759 = vsel %vm1755, %v1644, -inf
        %1760 = vmax.xlane.f32.xlu0 %v1759
        %v1761 = vpop.xlane.xlu0 %1760
        %v1762 = vsub.f32 %v1643, %v1758
        %v1763 = vsub.f32 %v1644, %v1761
        %v1764 = vmul.f32 %v1762, 1.442695
        %v1765 = vpow.pop %v1764
        %v1766 = vmul.f32 %v1763, 1.442695
        %v1767 = vpow.pop %v1766
        %1770 = vrot.lane.b32.xlu0 %v1765, 96
        %v1771 = vpop.permute.xlu0 %1770
        %1772 = vrot.lane.b32.xlu0 %v1767, 96
        %v1773 = vpop.permute.xlu0 %1772
        %v1776 = vsel %vm1670, %v1771, 0.0
        %1777 = vadd.xlane.f32.xlu0 %v1776
        %v1778 = vpop.xlane.xlu0 %1777
        %v1779 = vsel %vm1670, %v1773, 0.0
        %1780 = vadd.xlane.f32.xlu0 %v1779
        %v1781 = vpop.xlane.xlu0 %1780
        %v1782 = vrcp.pop %v1778
        %v1783 = vmul.f32 %v1778, %v1782
        %v1784 = vsub.f32 1.0, %v1783
        %v1785 = vmul.f32 %v1782, %v1784
        %v1786 = vadd.f32 %v1782, %v1785
        %vm1787 = vweird.f32 %v1778
        %vm1788 = vweird.f32 %v1782
        %vm1789 = vmor %vm1787, %vm1788
        %v1790 = vsel %vm1789, %v1782, %v1786
        %v1791 = vand.u32 2147483647, %v1778
        %vm1792 = vcmp.eq.f32.partialorder %v1791, 8.507059e+37
        %v1793 = vand.u32 %v1778, 2147483648
        %v1794 = vor.u32 1.1754944e-38, %v1793
        %v1795 = vsel %vm1792, %v1794, %v1790
        %v1796 = vmul.f32 %v1765, %v1795
        %v1797 = vrcp.pop %v1781
        %v1798 = vmul.f32 %v1781, %v1797
        %v1799 = vsub.f32 1.0, %v1798
        %v1800 = vmul.f32 %v1797, %v1799
        %v1801 = vadd.f32 %v1797, %v1800
        %vm1802 = vweird.f32 %v1781
        %vm1803 = vweird.f32 %v1797
        %vm1804 = vmor %vm1802, %vm1803
        %v1805 = vsel %vm1804, %v1797, %v1801
        %v1806 = vand.u32 2147483647, %v1781
        %vm1807 = vcmp.eq.f32.partialorder %v1806, 8.507059e+37
        %v1808 = vand.u32 %v1781, 2147483648
        %v1809 = vor.u32 1.1754944e-38, %v1808
        %v1810 = vsel %vm1807, %v1809, %v1805
        %v1811 = vmul.f32 %v1767, %v1810
        %v1812 = vsel %vm1649, %v1645, -inf
        %1813 = vmax.xlane.f32.xlu0 %v1812
        %v1814 = vpop.xlane.xlu0 %1813
        %v1815 = vsel %vm1649, %v1646, -inf
        %1816 = vmax.xlane.f32.xlu0 %v1815
        %v1817 = vpop.xlane.xlu0 %1816
        %v1818 = vsub.f32 %v1645, %v1814
        %v1819 = vsub.f32 %v1646, %v1817
        %v1820 = vmul.f32 %v1818, 1.442695
        %v1821 = vpow.pop %v1820
        %v1822 = vmul.f32 %v1819, 1.442695
        %v1823 = vpow.pop %v1822
        %1826 = vrot.lane.b32.xlu0 %v1821, 112
        %v1827 = vpop.permute.xlu0 %1826
        %1828 = vrot.lane.b32.xlu0 %v1823, 112
        %v1829 = vpop.permute.xlu0 %1828
        %v1832 = vsel %vm1670, %v1827, 0.0
        %1833 = vadd.xlane.f32.xlu0 %v1832
        %v1834 = vpop.xlane.xlu0 %1833
        %v1835 = vsel %vm1670, %v1829, 0.0
        %1836 = vadd.xlane.f32.xlu0 %v1835
        %v1837 = vpop.xlane.xlu0 %1836
        %v1838 = vrcp.pop %v1834
        %v1839 = vmul.f32 %v1834, %v1838
        %v1840 = vsub.f32 1.0, %v1839
        %v1841 = vmul.f32 %v1838, %v1840
        %v1842 = vadd.f32 %v1838, %v1841
        %vm1843 = vweird.f32 %v1834
        %vm1844 = vweird.f32 %v1838
        %vm1845 = vmor %vm1843, %vm1844
        %v1846 = vsel %vm1845, %v1838, %v1842
        %v1847 = vand.u32 2147483647, %v1834
        %vm1848 = vcmp.eq.f32.partialorder %v1847, 8.507059e+37
        %v1849 = vand.u32 %v1834, 2147483648
        %v1850 = vor.u32 1.1754944e-38, %v1849
        %v1851 = vsel %vm1848, %v1850, %v1846
        %v1852 = vmul.f32 %v1821, %v1851
        %v1853 = vrcp.pop %v1837
        %v1854 = vmul.f32 %v1837, %v1853
        %v1855 = vsub.f32 1.0, %v1854
        %v1856 = vmul.f32 %v1853, %v1855
        %v1857 = vadd.f32 %v1853, %v1856
        %vm1858 = vweird.f32 %v1837
        %vm1859 = vweird.f32 %v1853
        %vm1860 = vmor %vm1858, %vm1859
        %v1861 = vsel %vm1860, %v1853, %v1857
        %v1862 = vand.u32 2147483647, %v1837
        %vm1863 = vcmp.eq.f32.partialorder %v1862, 8.507059e+37
        %v1864 = vand.u32 %v1837, 2147483648
        %v1865 = vor.u32 1.1754944e-38, %v1864
        %v1866 = vsel %vm1863, %v1865, %v1861
        %v1867 = vmul.f32 %v1823, %v1866
        %vm1868 = vcmask 523648
        %v1869 = vsel %vm1868, %v1645, -inf
        %1870 = vmax.xlane.f32.xlu0 %v1869
        %v1871 = vpop.xlane.xlu0 %1870
        %v1872 = vsel %vm1868, %v1646, -inf
        %1873 = vmax.xlane.f32.xlu0 %v1872
        %v1874 = vpop.xlane.xlu0 %1873
        %v1875 = vsub.f32 %v1645, %v1871
        %v1876 = vsub.f32 %v1646, %v1874
        %v1877 = vmul.f32 %v1875, 1.442695
        %v1878 = vpow.pop %v1877
        %v1879 = vmul.f32 %v1876, 1.442695
        %v1880 = vpow.pop %v1879
        %1883 = vrot.lane.b32.xlu0 %v1878, 80
        %v1884 = vpop.permute.xlu0 %1883
        %1885 = vrot.lane.b32.xlu0 %v1880, 80
        %v1886 = vpop.permute.xlu0 %1885
        %v1889 = vsel %vm1670, %v1884, 0.0
        %1890 = vadd.xlane.f32.xlu0 %v1889
        %v1891 = vpop.xlane.xlu0 %1890
        %v1892 = vsel %vm1670, %v1886, 0.0
        %1893 = vadd.xlane.f32.xlu0 %v1892
        %v1894 = vpop.xlane.xlu0 %1893
        %v1895 = vrcp.pop %v1891
        %v1896 = vmul.f32 %v1891, %v1895
        %v1897 = vsub.f32 1.0, %v1896
        %v1898 = vmul.f32 %v1895, %v1897
        %v1899 = vadd.f32 %v1895, %v1898
        %vm1900 = vweird.f32 %v1891
        %vm1901 = vweird.f32 %v1895
        %vm1902 = vmor %vm1900, %vm1901
        %v1903 = vsel %vm1902, %v1895, %v1899
        %v1904 = vand.u32 2147483647, %v1891
        %vm1905 = vcmp.eq.f32.partialorder %v1904, 8.507059e+37
        %v1906 = vand.u32 %v1891, 2147483648
        %v1907 = vor.u32 1.1754944e-38, %v1906
        %v1908 = vsel %vm1905, %v1907, %v1903
        %v1909 = vmul.f32 %v1878, %v1908
        %v1910 = vrcp.pop %v1894
        %v1911 = vmul.f32 %v1894, %v1910
        %v1912 = vsub.f32 1.0, %v1911
        %v1913 = vmul.f32 %v1910, %v1912
        %v1914 = vadd.f32 %v1910, %v1913
        %vm1915 = vweird.f32 %v1894
        %vm1916 = vweird.f32 %v1910
        %vm1917 = vmor %vm1915, %vm1916
        %v1918 = vsel %vm1917, %v1910, %v1914
        %v1919 = vand.u32 2147483647, %v1894
        %vm1920 = vcmp.eq.f32.partialorder %v1919, 8.507059e+37
        %v1921 = vand.u32 %v1894, 2147483648
        %v1922 = vor.u32 1.1754944e-38, %v1921
        %v1923 = vsel %vm1920, %v1922, %v1918
        %v1924 = vmul.f32 %v1880, %v1923
        %v1925 = vsel %vm1755, %v1647, -inf
        %1926 = vmax.xlane.f32.xlu0 %v1925
        %v1927 = vpop.xlane.xlu0 %1926
        %v1928 = vsel %vm1755, %v1648, -inf
        %1929 = vmax.xlane.f32.xlu0 %v1928
        %v1930 = vpop.xlane.xlu0 %1929
        %v1931 = vsub.f32 %v1647, %v1927
        %v1932 = vsub.f32 %v1648, %v1930
        %v1933 = vmul.f32 %v1931, 1.442695
        %v1934 = vpow.pop %v1933
        %v1935 = vmul.f32 %v1932, 1.442695
        %v1936 = vpow.pop %v1935
        %1939 = vrot.lane.b32.xlu0 %v1934, 96
        %v1940 = vpop.permute.xlu0 %1939
        %1941 = vrot.lane.b32.xlu0 %v1936, 96
        %v1942 = vpop.permute.xlu0 %1941
        %v1945 = vsel %vm1670, %v1940, 0.0
        %1946 = vadd.xlane.f32.xlu0 %v1945
        %v1947 = vpop.xlane.xlu0 %1946
        %v1948 = vsel %vm1670, %v1942, 0.0
        %1949 = vadd.xlane.f32.xlu0 %v1948
        %v1950 = vpop.xlane.xlu0 %1949
        %v1951 = vrcp.pop %v1947
        %v1952 = vmul.f32 %v1947, %v1951
        %v1953 = vsub.f32 1.0, %v1952
        %v1954 = vmul.f32 %v1951, %v1953
        %v1955 = vadd.f32 %v1951, %v1954
        %vm1956 = vweird.f32 %v1947
        %vm1957 = vweird.f32 %v1951
        %vm1958 = vmor %vm1956, %vm1957
        %v1959 = vsel %vm1958, %v1951, %v1955
        %v1960 = vand.u32 2147483647, %v1947
        %vm1961 = vcmp.eq.f32.partialorder %v1960, 8.507059e+37
        %v1962 = vand.u32 %v1947, 2147483648
        %v1963 = vor.u32 1.1754944e-38, %v1962
        %v1964 = vsel %vm1961, %v1963, %v1959
        %v1965 = vmul.f32 %v1934, %v1964
        %v1966 = vrcp.pop %v1950
        %v1967 = vmul.f32 %v1950, %v1966
        %v1968 = vsub.f32 1.0, %v1967
        %v1969 = vmul.f32 %v1966, %v1968
        %v1970 = vadd.f32 %v1966, %v1969
        %vm1971 = vweird.f32 %v1950
        %vm1972 = vweird.f32 %v1966
        %vm1973 = vmor %vm1971, %vm1972
        %v1974 = vsel %vm1973, %v1966, %v1970
        %v1975 = vand.u32 2147483647, %v1950
        %vm1976 = vcmp.eq.f32.partialorder %v1975, 8.507059e+37
        %v1977 = vand.u32 %v1950, 2147483648
        %v1978 = vor.u32 1.1754944e-38, %v1977
        %v1979 = vsel %vm1976, %v1978, %v1974
        %v1980 = vmul.f32 %v1936, %v1979
        %v1981 = vlaneseq
        %v1982 = vshrl.u32 %v1981, 7
        %v1983 = vadd.s32 %v1982, 8
        %v1984 = vlaneseq
        %v1985 = vand.u32 %v1984, 127
        %1988 = vrot.lane.b32.xlu0 %v1691, 112
        %v1989 = vpop.permute.xlu0 %1988
        %1990 = vrot.lane.b32.xlu0 %v1706, 112
        %v1991 = vpop.permute.xlu0 %1990
        %1994 = vrot.lane.b32.xlu0 %v1796, 96
        %v1995 = vpop.permute.xlu0 %1994
        %1996 = vrot.lane.b32.xlu0 %v1811, 96
        %v1997 = vpop.permute.xlu0 %1996
        %v2000 = vsel %vm1670, %v1989, 0
        %v2002 = vsel %vm1670, %v1991, 0
        %2004 = vmatpush.msra.mxu0 0.0
        %2005 = vmatpush.msra.mxu0 0.0
        %2006 = vmatpush.msra.mxu0 0.0
        %2007 = vmatpush.msra.mxu0 0.0
        %2008 = vmatpush.msra.mxu0 0.0
        %2009 = vmatpush.msra.mxu0 0.0
        %2010 = vmatpush.msra.mxu0 0.0
        %2011 = vmatpush.msra.mxu0 0.0
        %2012 = vmatpush.msra.mxu0 0.0
        %2013 = vmatpush.msra.mxu0 0.0
        %2014 = vmatpush.msra.mxu0 0.0
        %2015 = vmatpush.msra.mxu0 0.0
        %2016 = vmatpush.msra.mxu0 0.0
        %2017 = vmatpush.msra.mxu0 0.0
        %2018 = vmatpush.msra.mxu0 %v1997
        %2019 = vmatpush.msra.mxu0 %v1995
        %2020 = vmatmul.f32.gmra.mxu0 %v2000
        %v2021 = vpop.f32.mrf.mxu0
        %v2022 = vadd.f32 0.0, %v2021
        %2023 = vmatmul.f32.gmra.mxu0 %v2002
        %v2024 = vpop.f32.mrf.mxu0
        %v2025 = vadd.f32 0.0, %v2024
        %2026 = vdwg.mxu0
        %2029 = vrot.lane.b32.xlu0 %v1852, 112
        %v2030 = vpop.permute.xlu0 %2029
        %2031 = vrot.lane.b32.xlu0 %v1867, 112
        %v2032 = vpop.permute.xlu0 %2031
        %v2033 = vsel %vm1670, %v2030, 0
        %v2035 = vsel %vm1670, %v2032, 0
        %2037 = vmatpush.msra.mxu0 0.0
        %2038 = vmatpush.msra.mxu0 0.0
        %2039 = vmatpush.msra.mxu0 0.0
        %2040 = vmatpush.msra.mxu0 0.0
        %2041 = vmatpush.msra.mxu0 0.0
        %2042 = vmatpush.msra.mxu0 0.0
        %2043 = vmatpush.msra.mxu0 0.0
        %2044 = vmatpush.msra.mxu0 0.0
        %2045 = vmatpush.msra.mxu0 0.0
        %2046 = vmatpush.msra.mxu0 0.0
        %2047 = vmatpush.msra.mxu0 0.0
        %2048 = vmatpush.msra.mxu0 0.0
        %2049 = vmatpush.msra.mxu0 0.0
        %2050 = vmatpush.msra.mxu0 0.0
        %2051 = vmatpush.msra.mxu0 %v1754
        %2052 = vmatpush.msra.mxu0 %v1739
        %2053 = vmatmul.f32.gmra.mxu0 %v2033
        %v2054 = vpop.f32.mrf.mxu0
        %v2055 = vadd.f32 0.0, %v2054
        %2056 = vmatmul.f32.gmra.mxu0 %v2035
        %v2057 = vpop.f32.mrf.mxu0
        %v2058 = vadd.f32 0.0, %v2057
        %2059 = vdwg.mxu0
        %v2061 = vsel %vm1670, %v2022, 0
        %v2064 = vsel %vm1670, %v2025, 0
        %2066 = vmatpush.msra.mxu0 0.0
        %2067 = vmatpush.msra.mxu0 0.0
        %2068 = vmatpush.msra.mxu0 0.0
        %2069 = vmatpush.msra.mxu0 0.0
        %2070 = vmatpush.msra.mxu0 0.0
        %2071 = vmatpush.msra.mxu0 0.0
        %2072 = vmatpush.msra.mxu0 0.0
        %2073 = vmatpush.msra.mxu0 0.0
        %2074 = vmatpush.msra.mxu0 0.0
        %2075 = vmatpush.msra.mxu0 0.0
        %2076 = vmatpush.msra.mxu0 0.0
        %2077 = vmatpush.msra.mxu0 0.0
        %2078 = vmatpush.msra.mxu0 0.0
        %2079 = vmatpush.msra.mxu0 0.0
        %2080 = vmatpush.msra.mxu0 %v2058
        %2081 = vmatpush.msra.mxu0 %v2055
        %2082 = vmatmul.f32.gmra.mxu0 %v2061
        %v2083 = vpop.f32.mrf.mxu0
        %v2084 = vadd.f32 0.0, %v2083
        %2085 = vmatmul.f32.gmra.mxu0 %v2064
        %v2086 = vpop.f32.mrf.mxu0
        %v2087 = vadd.f32 0.0, %v2086
        %2088 = vdwg.mxu0
        %v2089 = vsel %vm1670, %v2084, 0.0
        %2090 = vadd.xlane.f32.xlu0 %v2089
        %v2091 = vpop.xlane.xlu0 %2090
        %v2092 = vsel %vm1670, %v2087, 0.0
        %2093 = vadd.xlane.f32.xlu0 %v2092
        %v2094 = vpop.xlane.xlu0 %2093
        %v2095 = vadd.f32 %v2091, 1.6e-19
        %v2096 = vadd.f32 %v2094, 1.6e-19
        %v2097 = vlog2.pop %v2095
        %v2098 = vmul.f32 %v2097, 0.6931472
        %v2099 = vlog2.pop %v2096
        %v2100 = vmul.f32 %v2099, 0.6931472
        %vm2101 = vcmp.eq.s32.totalorder %v1982, %v1985
        %vm2102 = vcmp.eq.s32.totalorder %v1983, %v1985
        %v2103 = vsel %vm2101, %v2084, 0.0
        %v2104 = vsel %vm2102, %v2087, 0.0
        %v2105 = vsel %vm1670, %v2103, 0.0
        %2106 = vadd.xlane.f32.xlu0 %v2105
        %v2107 = vpop.xlane.xlu0 %2106
        %v2108 = vsel %vm1670, %v2104, 0.0
        %2109 = vadd.xlane.f32.xlu0 %v2108
        %v2110 = vpop.xlane.xlu0 %2109
        %v2111 = vadd.f32 %v2107, 1e-20
        %v2112 = vadd.f32 %v2110, 1e-20
        %v2113 = vlog2.pop %v2111
        %v2114 = vmul.f32 %v2113, 0.6931472
        %v2115 = vlog2.pop %v2112
        %v2116 = vmul.f32 %v2115, 0.6931472
        %v2117 = vsub.f32 %v2098, %v2114
        %v2118 = vsub.f32 %v2100, %v2116
        %v2119 = vsel %vm1670, %v2084, -inf
        %2120 = vmax.xlane.f32.xlu0 %v2119
        %v2121 = vpop.xlane.xlu0 %2120
        %v2122 = vsel %vm1670, %v2087, -inf
        %2123 = vmax.xlane.f32.xlu0 %v2122
        %v2124 = vpop.xlane.xlu0 %2123
        %vm2125 = vcmp.eq.f32.partialorder %v2084, %v2121
        %vm2126 = vcmp.eq.f32.partialorder %v2087, %v2124
        %v2127 = vsel %vm2125, %v1985, 16
        %v2128 = vsel %vm2126, %v1985, 16
        %v2129 = vsel %vm1670, %v2127, 2147483647
        %v2130 = vand.u32 %v2129, 65535
        %v2131 = vshra.s32 %v2129, 16
        %v2132 = vcvt.s32.f32 %v2130
        %v2133 = vcvt.s32.f32 %v2131
        %2134 = vmin.xlane.f32.xlu0 %v2133
        %v2135 = vpop.xlane.xlu0 %2134
        %vm2136 = vcmp.eq.f32.partialorder %v2133, %v2135
        %v2137 = vsel %vm2136, %v2132, inf
        %2138 = vmin.xlane.f32.xlu0 %v2137
        %v2139 = vpop.xlane.xlu0 %2138
        %v2140 = vcvt.f32.s32 %v2139
        %v2141 = vcvt.f32.s32 %v2135
        %v2142 = vshll.u32 %v2141, 16
        %v2143 = vadd.s32 %v2142, %v2140
        %v2144 = vsel %vm1670, %v2128, 2147483647
        %v2145 = vand.u32 %v2144, 65535
        %v2146 = vshra.s32 %v2144, 16
        %v2147 = vcvt.s32.f32 %v2145
        %v2148 = vcvt.s32.f32 %v2146
        %2149 = vmin.xlane.f32.xlu0 %v2148
        %v2150 = vpop.xlane.xlu0 %2149
        %vm2151 = vcmp.eq.f32.partialorder %v2148, %v2150
        %v2152 = vsel %vm2151, %v2147, inf
        %2153 = vmin.xlane.f32.xlu0 %v2152
        %v2154 = vpop.xlane.xlu0 %2153
        %v2155 = vcvt.f32.s32 %v2154
        %v2156 = vcvt.f32.s32 %v2150
        %v2157 = vshll.u32 %v2156, 16
        %v2158 = vadd.s32 %v2157, %v2155
        %vm2159 = vcmp.eq.s32.totalorder %v2143, %v1982
        %vm2160 = vcmp.eq.s32.totalorder %v2158, %v1983
        %v2161 = vsel %vm2159, 1, 0
        %v2162 = vsel %vm2160, 1, 0
        %v2163 = vcvt.s32.f32 %v2161
        %v2164 = vcvt.s32.f32 %v2162
        %vm2165 = vcmask 7168
        %v2166 = vsel %vm2165, %v2117, 0.0
        %v2167 = vsel %vm2165, %v2118, 0.0
        %v2168 = vadd.f32 %v2166, %v2167
        %2169 = vadd.xlane.f32.xlu0 %v2168
        %v2170 = vpop.xlane.xlu0 %2169
        %v2171 = vrot.slane %v2170, 4
        %v2172 = vadd.f32 %v2170, %v2171
        %v2173 = vrot.slane %v2172, 2
        %v2174 = vadd.f32 %v2172, %v2173
        %v2175 = vrot.slane %v2174, 1
        %v2176 = vadd.f32 %v2174, %v2175
        %s2177 = vtos %v2176
        %v2178 = vstv %s2177
        %v2179 = vrcp.pop 16.0
        %v2180 = vmul.f32 16.0, %v2179
        %v2181 = vsub.f32 1.0, %v2180
        %v2182 = vmul.f32 %v2179, %v2181
        %v2183 = vadd.f32 %v2179, %v2182
        %vm2184 = vweird.f32 %v2179
        %v2185 = vsel %vm2184, %v2179, %v2183
        %v2186 = vmul.f32 %v2178, %v2185
        %v2187 = vsel %vm2165, %v2163, 0.0
        %v2188 = vsel %vm2165, %v2164, 0.0
        %v2189 = vadd.f32 %v2187, %v2188
        %2190 = vadd.xlane.f32.xlu0 %v2189
        %v2191 = vpop.xlane.xlu0 %2190
        %v2192 = vrot.slane %v2191, 4
        %v2193 = vadd.f32 %v2191, %v2192
        %v2194 = vrot.slane %v2193, 2
        %v2195 = vadd.f32 %v2193, %v2194
        %v2196 = vrot.slane %v2195, 1
        %v2197 = vadd.f32 %v2195, %v2196
        %s2198 = vtos %v2197
        %v2199 = vstv %s2198
        %v2200 = vmul.f32 %v2199, %v2185
        %vm2201 = vcmp.eq.s32.totalorder %v1985, 0
        %v2202 = vsel %vm2201, %v2186, 0.0
        %v2203 = vsel %vm2201, %v2200, 0.0
        %2206 = vrot.lane.b32.xlu0 %v1909, 80
        %v2207 = vpop.permute.xlu0 %2206
        %2208 = vrot.lane.b32.xlu0 %v1924, 80
        %v2209 = vpop.permute.xlu0 %2208
        %2212 = vmatpush.msra.mxu0 0.0
        %2213 = vmatpush.msra.mxu0 0.0
        %2214 = vmatpush.msra.mxu0 0.0
        %2215 = vmatpush.msra.mxu0 0.0
        %2216 = vmatpush.msra.mxu0 0.0
        %2217 = vmatpush.msra.mxu0 0.0
        %2218 = vmatpush.msra.mxu0 0.0
        %2219 = vmatpush.msra.mxu0 0.0
        %2220 = vmatpush.msra.mxu0 0.0
        %2221 = vmatpush.msra.mxu0 0.0
        %2222 = vmatpush.msra.mxu0 0.0
        %2223 = vmatpush.msra.mxu0 0.0
        %2224 = vmatpush.msra.mxu0 0.0
        %2225 = vmatpush.msra.mxu0 0.0
        %2226 = vmatpush.msra.mxu0 %v2209
        %2227 = vmatpush.msra.mxu0 %v2207
        %2228 = vmatmul.f32.gmra.mxu0 %v2061
        %v2229 = vpop.f32.mrf.mxu0
        %v2230 = vadd.f32 0.0, %v2229
        %2231 = vmatmul.f32.gmra.mxu0 %v2064
        %v2232 = vpop.f32.mrf.mxu0
        %v2233 = vadd.f32 0.0, %v2232
        %2234 = vdwg.mxu0
        %2237 = vrot.lane.b32.xlu0 %v1965, 96
        %v2238 = vpop.permute.xlu0 %2237
        %2239 = vrot.lane.b32.xlu0 %v1980, 96
        %v2240 = vpop.permute.xlu0 %2239
        %v2241 = vsel %vm1670, %v2238, 0
        %v2243 = vsel %vm1670, %v2240, 0
        %2245 = vmatpush.msra.mxu0 0.0
        %2246 = vmatpush.msra.mxu0 0.0
        %2247 = vmatpush.msra.mxu0 0.0
        %2248 = vmatpush.msra.mxu0 0.0
        %2249 = vmatpush.msra.mxu0 0.0
        %2250 = vmatpush.msra.mxu0 0.0
        %2251 = vmatpush.msra.mxu0 0.0
        %2252 = vmatpush.msra.mxu0 0.0
        %2253 = vmatpush.msra.mxu0 0.0
        %2254 = vmatpush.msra.mxu0 0.0
        %2255 = vmatpush.msra.mxu0 0.0
        %2256 = vmatpush.msra.mxu0 0.0
        %2257 = vmatpush.msra.mxu0 0.0
        %2258 = vmatpush.msra.mxu0 0.0
        %2259 = vmatpush.msra.mxu0 %v2058
        %2260 = vmatpush.msra.mxu0 %v2055
        %2261 = vmatmul.f32.gmra.mxu0 %v2241
        %v2262 = vpop.f32.mrf.mxu0
        %v2263 = vadd.f32 0.0, %v2262
        %2264 = vmatmul.f32.gmra.mxu0 %v2243
        %v2265 = vpop.f32.mrf.mxu0
        %v2266 = vadd.f32 0.0, %v2265
        %2267 = vdwg.mxu0
        %v2269 = vsel %vm1670, %v2230, 0
        %v2272 = vsel %vm1670, %v2233, 0
        %2274 = vmatpush.msra.mxu0 0.0
        %2275 = vmatpush.msra.mxu0 0.0
        %2276 = vmatpush.msra.mxu0 0.0
        %2277 = vmatpush.msra.mxu0 0.0
        %2278 = vmatpush.msra.mxu0 0.0
        %2279 = vmatpush.msra.mxu0 0.0
        %2280 = vmatpush.msra.mxu0 0.0
        %2281 = vmatpush.msra.mxu0 0.0
        %2282 = vmatpush.msra.mxu0 0.0
        %2283 = vmatpush.msra.mxu0 0.0
        %2284 = vmatpush.msra.mxu0 0.0
        %2285 = vmatpush.msra.mxu0 0.0
        %2286 = vmatpush.msra.mxu0 0.0
        %2287 = vmatpush.msra.mxu0 0.0
        %2288 = vmatpush.msra.mxu0 %v2266
        %2289 = vmatpush.msra.mxu0 %v2263
        %2290 = vmatmul.f32.gmra.mxu0 %v2269
        %v2291 = vpop.f32.mrf.mxu0
        %v2292 = vadd.f32 0.0, %v2291
        %2293 = vmatmul.f32.gmra.mxu0 %v2272
        %v2294 = vpop.f32.mrf.mxu0
        %v2295 = vadd.f32 0.0, %v2294
        %2296 = vdwg.mxu0
        %v2297 = vsel %vm1670, %v2292, 0.0
        %2298 = vadd.xlane.f32.xlu0 %v2297
        %v2299 = vpop.xlane.xlu0 %2298
        %v2300 = vsel %vm1670, %v2295, 0.0
        %2301 = vadd.xlane.f32.xlu0 %v2300
        %v2302 = vpop.xlane.xlu0 %2301
        %v2303 = vadd.f32 %v2299, 1.6e-19
        %v2304 = vadd.f32 %v2302, 1.6e-19
        %v2305 = vlog2.pop %v2303
        %v2306 = vmul.f32 %v2305, 0.6931472
        %v2307 = vlog2.pop %v2304
        %v2308 = vmul.f32 %v2307, 0.6931472
        %v2309 = vsel %vm2101, %v2292, 0.0
        %v2310 = vsel %vm2102, %v2295, 0.0
        %v2311 = vsel %vm1670, %v2309, 0.0
        %2312 = vadd.xlane.f32.xlu0 %v2311
        %v2313 = vpop.xlane.xlu0 %2312
        %v2314 = vsel %vm1670, %v2310, 0.0
        %2315 = vadd.xlane.f32.xlu0 %v2314
        %v2316 = vpop.xlane.xlu0 %2315
        %v2317 = vadd.f32 %v2313, 1e-20
        %v2318 = vadd.f32 %v2316, 1e-20
        %v2319 = vlog2.pop %v2317
        %v2320 = vmul.f32 %v2319, 0.6931472
        %v2321 = vlog2.pop %v2318
        %v2322 = vmul.f32 %v2321, 0.6931472
        %v2323 = vsub.f32 %v2306, %v2320
        %v2324 = vsub.f32 %v2308, %v2322
        %v2325 = vsel %vm1670, %v2292, -inf
        %2326 = vmax.xlane.f32.xlu0 %v2325
        %v2327 = vpop.xlane.xlu0 %2326
        %v2328 = vsel %vm1670, %v2295, -inf
        %2329 = vmax.xlane.f32.xlu0 %v2328
        %v2330 = vpop.xlane.xlu0 %2329
        %vm2331 = vcmp.eq.f32.partialorder %v2292, %v2327
        %vm2332 = vcmp.eq.f32.partialorder %v2295, %v2330
        %v2333 = vsel %vm2331, %v1985, 16
        %v2334 = vsel %vm2332, %v1985, 16
        %v2335 = vsel %vm1670, %v2333, 2147483647
        %v2336 = vand.u32 %v2335, 65535
        %v2337 = vshra.s32 %v2335, 16
        %v2338 = vcvt.s32.f32 %v2336
        %v2339 = vcvt.s32.f32 %v2337
        %2340 = vmin.xlane.f32.xlu0 %v2339
        %v2341 = vpop.xlane.xlu0 %2340
        %vm2342 = vcmp.eq.f32.partialorder %v2339, %v2341
        %v2343 = vsel %vm2342, %v2338, inf
        %2344 = vmin.xlane.f32.xlu0 %v2343
        %v2345 = vpop.xlane.xlu0 %2344
        %v2346 = vcvt.f32.s32 %v2345
        %v2347 = vcvt.f32.s32 %v2341
        %v2348 = vshll.u32 %v2347, 16
        %v2349 = vadd.s32 %v2348, %v2346
        %v2350 = vsel %vm1670, %v2334, 2147483647
        %v2351 = vand.u32 %v2350, 65535
        %v2352 = vshra.s32 %v2350, 16
        %v2353 = vcvt.s32.f32 %v2351
        %v2354 = vcvt.s32.f32 %v2352
        %2355 = vmin.xlane.f32.xlu0 %v2354
        %v2356 = vpop.xlane.xlu0 %2355
        %vm2357 = vcmp.eq.f32.partialorder %v2354, %v2356
        %v2358 = vsel %vm2357, %v2353, inf
        %2359 = vmin.xlane.f32.xlu0 %v2358
        %v2360 = vpop.xlane.xlu0 %2359
        %v2361 = vcvt.f32.s32 %v2360
        %v2362 = vcvt.f32.s32 %v2356
        %v2363 = vshll.u32 %v2362, 16
        %v2364 = vadd.s32 %v2363, %v2361
        %vm2365 = vcmp.eq.s32.totalorder %v2349, %v1982
        %vm2366 = vcmp.eq.s32.totalorder %v2364, %v1983
        %v2367 = vsel %vm2365, 1, 0
        %v2368 = vsel %vm2366, 1, 0
        %v2369 = vcvt.s32.f32 %v2367
        %v2370 = vcvt.s32.f32 %v2368
        %v2371 = vsel %vm2165, %v2323, 0.0
        %v2372 = vsel %vm2165, %v2324, 0.0
        %v2373 = vadd.f32 %v2371, %v2372
        %2374 = vadd.xlane.f32.xlu0 %v2373
        %v2375 = vpop.xlane.xlu0 %2374
        %v2376 = vrot.slane %v2375, 4
        %v2377 = vadd.f32 %v2375, %v2376
        %v2378 = vrot.slane %v2377, 2
        %v2379 = vadd.f32 %v2377, %v2378
        %v2380 = vrot.slane %v2379, 1
        %v2381 = vadd.f32 %v2379, %v2380
        %s2382 = vtos %v2381
        %v2383 = vstv %s2382
        %v2384 = vmul.f32 %v2383, %v2185
        %v2385 = vsel %vm2165, %v2369, 0.0
        %v2386 = vsel %vm2165, %v2370, 0.0
        %v2387 = vadd.f32 %v2385, %v2386
        %2388 = vadd.xlane.f32.xlu0 %v2387
        %v2389 = vpop.xlane.xlu0 %2388
        %v2390 = vrot.slane %v2389, 4
        %v2391 = vadd.f32 %v2389, %v2390
        %v2392 = vrot.slane %v2391, 2
        %v2393 = vadd.f32 %v2391, %v2392
        %v2394 = vrot.slane %v2393, 1
        %v2395 = vadd.f32 %v2393, %v2394
        %s2396 = vtos %v2395
        %v2397 = vstv %s2396
        %v2398 = vmul.f32 %v2397, %v2185
        %vm2399 = vcmp.eq.s32.totalorder %v1985, 1
        %v2400 = vsel %vm2399, %v2384, %v2202
        %v2401 = vsel %vm2399, %v2398, %v2203
        %vm2402 = vcmask 1040384
        %v2403 = vsel %vm2402, %v2400, %v2401
        %vm2404 = vcmask 1041408
        %v2405 = vsel %vm2404, %v2403, 0.0
        %2406 = vst [vmem:[%s260] sm:$0xff] %v2405
        %s2407 = sand.u32 %s139, 1
        %s2408 = scalar_lea.sflag [#allocation3], %s2407
        %s2409 = sand.u32 %s139, 1
        %s2410 = smul.addr %s2409, 64
        %s2411 = scalar_lea.vmem [#allocation2], %s2410
        %p2412 = scmp.lt.s32.totalorder %s21, 1
        %s2413 = scalar_select %p2412, %s21, 1
        %s2414 = smul.addr %s2413, 8
        %s2415 = scalar_lea.vmem %s6, %s2414
        // Predicated region
        $region41: #{crw_forward.1} parent=39 // pred_check
          %p2416 = pneg %p149
        $region42: #{crw_forward.1} parent=39 // pred_check_branch
          %2418 = sbr.rel (%p2416) target = $region44
        $region43: #{crw_forward.1} parent=39 // pred_region
          %2420 = vsyncadd %s2408, 0
          %s2421 = smul.addr %s21, 8
          %s2422 = smul.addr %s2421, 8
          %s2423 = scalar_lea.hbm %s5, %s2422
          %s2424 = sshll.u32 %s2411, 4
          %s2425 = int_to_ptr.vmem [resolvable:$true] %s2424
          %s2426 = sshll.u32 %s2423, 4
          %s2427 = int_to_ptr.hbm [resolvable:$true] %s2426
          %2432 = dma.vmem_to_hbm [thread:$0]  %s2425, 1024, %s2427, %s2408, 128, 128, 8
        $region44: #{crw_forward.1} parent=39 // pred_fallthru
          _
        // Predicated region
        $region45: #{crw_forward.1} parent=39 // pred_check
          %p2433 = pneg %p175
        $region46: #{crw_forward.1} parent=39 // pred_check_branch
          %2435 = sbr.rel (%p2433) target = $region48
        $region47: #{crw_forward.1} parent=39 // pred_region
          _
        $region48: #{crw_forward.1} parent=39 // pred_fallthru
          _
      $region40: #{crw_forward.1} parent=5 // pred_fallthru
        _
      %p2436 = scmp.le.s32.totalorder 2, %s16
      // Predicated region
      $region49: #{crw_forward.1} parent=5 // pred_check
        %p2437 = pneg %p2436
      $region50: #{crw_forward.1} parent=5 // pred_check_branch
        %2439 = sbr.rel (%p2437) target = $region52
      $region51: #{crw_forward.1} parent=5 // pred_region
        %s2440 = ssub.s32 %s16, 2
        // Predicated region
        $region53: #{crw_forward.1} parent=51 // pred_check
          %p2441 = pneg %p155
        $region54: #{crw_forward.1} parent=51 // pred_check_branch
          %2443 = sbr.rel (%p2441) target = $region56
        $region55: #{crw_forward.1} parent=51 // pred_region
          %s2444 = sand.u32 %s140, 1
          %s2445 = scalar_lea.sflag [#allocation3], %s2444
          %s2446 = sand.u32 %s140, 1
          %s2447 = smul.addr %s2446, 64
          %s2448 = scalar_lea.vmem [#allocation2], %s2447
          %2450 = dma.done %s2445, 1024
        $region56: #{crw_forward.1} parent=51 // pred_fallthru
          _
        // Predicated region
        $region57: #{crw_forward.1} parent=51 // pred_check
          %p2451 = pneg %p181
        $region58: #{crw_forward.1} parent=51 // pred_check_branch
          %2453 = sbr.rel (%p2451) target = $region60
        $region59: #{crw_forward.1} parent=51 // pred_region
          %p2454 = scmp.lt.s32.totalorder %s22, 1
          %s2455 = scalar_select %p2454, %s22, 1
          %s2456 = smul.addr %s2455, 8
          %s2457 = scalar_lea.vmem %s6, %s2456
        $region60: #{crw_forward.1} parent=51 // pred_fallthru
          _
      $region52: #{crw_forward.1} parent=5 // pred_fallthru
        _
    $region6: #{crw_forward.1} parent=1 // loop_footer
      %s20 = sadd.s32 1, %s16
    $region7: #{crw_forward.1} parent=1 // loop_footer_branch
      %15 = sbr.rel target = $region3
    $region8: #{crw_forward.1} parent=1 // loop_exit
      _
    %2458 = vsyncpa [#allocation3], 1
    %s2459 = scalar_lea.sflag [#allocation3], 1
    %2460 = vsyncpa %s2459, 1

</llo_original>
